<compile_context>
chip_gen: v7x
topology: tpu7x:2x2x1
jax: 0.10.0
libtpu: 0.0.40
codegen_flags: <defaults>
</compile_context>

<pallas_src>
import functools

import jax
import jax.numpy as jnp
from jax.experimental import pallas as pl
from jax.experimental.pallas import tpu as pltpu

STANDARDIZED_OB_CLAMPS = (-5.0, 5.0)
LEAKY_SLOPE = 0.1
LANE = 128


def _round_up(x, m):
    return ((x + m - 1) // m) * m


def _leaky_relu(x):
    return jnp.where(x >= 0, x, LEAKY_SLOPE * x)


def _disc_kernel(x_ref, stats_ref, w1_ref, b1_ref, w2_ref, b2_ref,
                 w3_ref, b3_ref, out_ref, xpad_ref, *, in_dim):
    # Zero-fill the MXU contraction width in VMEM (reviewer item: do the lane
    # zero-fill in-kernel instead of inflating HBM traffic in the wrapper).
    # Re-zeroed every step so it is correct even when the "parallel" batch
    # axis is split across TensorCores (each core has its own scratch).
    xpad_ref[...] = jnp.zeros_like(xpad_ref)
    xpad_ref[:, :in_dim] = x_ref[...]

    # Per-lane standardize + clamp: obs lanes get (x-mean)*inv_std clipped to
    # +-5; action lanes have mean=0, inv_std=1, bounds=+-inf (raw pass-through,
    # state_only=False); padding lanes stay exactly 0.
    mean = stats_ref[0:1, :]
    inv_std = stats_ref[1:2, :]
    lo = stats_ref[2:3, :]
    hi = stats_ref[3:4, :]
    x = jnp.clip((xpad_ref[...] - mean) * inv_std, lo, hi)

    # fc_block_1 (single fused dot over the merged obs+action stream)
    h1 = jnp.dot(x, w1_ref[...], preferred_element_type=jnp.float32,
                 precision=jax.lax.Precision.HIGHEST) + b1_ref[...]
    h1 = _leaky_relu(h1)

    # fc_block_2
    h2 = jnp.dot(h1, w2_ref[...], preferred_element_type=jnp.float32,
                 precision=jax.lax.Precision.HIGHEST) + b2_ref[...]
    h2 = _leaky_relu(h2)

    # d_head as a lane reduction -> (bt, 1) output, tiny HBM writeback.
    out_ref[...] = jnp.sum(h2 * w3_ref[...], axis=1, keepdims=True) + b3_ref[...]


def prepare_params(params, ob_dim, ac_dim):
    """One-time per-parameter preprocessing (hoisted out of the per-call path):
    fuse/transpose W1, zero-pad weight feature dims to 128 lanes, and build the
    per-lane standardization / clamp vectors for the merged obs+action input."""
    in_dim = ob_dim + ac_dim
    hid0 = params["w1"].shape[0]
    hid1 = params["w2"].shape[0]
    k_pad = _round_up(in_dim, LANE)
    h0_p = _round_up(hid0, LANE)
    h1_p = _round_up(hid1, LANE)

    def pad2(x, rows, cols):
        return jnp.pad(x, ((0, rows - x.shape[0]), (0, cols - x.shape[1])))

    # stats rows: [mean, inv_std, clamp_lo, clamp_hi], per input lane.
    mean = jnp.zeros((1, k_pad), jnp.float32).at[:, :ob_dim].set(params["rms_mean"])
    inv_std = jnp.ones((1, k_pad), jnp.float32).at[:, :ob_dim].set(1.0 / params["rms_std"])
    lo = jnp.full((1, k_pad), -jnp.inf, jnp.float32).at[:, :ob_dim].set(
        STANDARDIZED_OB_CLAMPS[0])
    hi = jnp.full((1, k_pad), jnp.inf, jnp.float32).at[:, :ob_dim].set(
        STANDARDIZED_OB_CLAMPS[1])
    stats = jnp.concatenate([mean, inv_std, lo, hi], axis=0)       # (4, k_pad)

    return {
        "stats": stats,
        "w1": pad2(params["w1"].T, k_pad, h0_p),      # (in_dim, hid0) -> (128, h0_p)
        "b1": pad2(params["b1"].reshape(1, -1), 1, h0_p),
        "w2": pad2(params["w2"].T, h0_p, h1_p),
        "b2": pad2(params["b2"].reshape(1, -1), 1, h1_p),
        "w3_row": pad2(params["w3"], 1, h1_p),        # (1, hid1) -> (1, h1_p)
        "b3": params["b3"].reshape(1, 1).astype(jnp.float32),
    }


def discriminator_forward(input_a, input_b, prep, *, batch_tile=512):
    """input_a: (B, ob_dim) f32, input_b: (B, ac_dim) f32 -> (B, 1) f32."""
    B, ob_dim = input_a.shape
    _, ac_dim = input_b.shape
    in_dim = ob_dim + ac_dim

    k_pad = prep["stats"].shape[1]
    h0_p = prep["w1"].shape[1]
    h1_p = prep["w2"].shape[1]

    # Single merged activation stream (no lane padding -> no HBM inflation).
    x = jnp.concatenate([input_a, input_b], axis=-1)               # (B, in_dim)

    # Batch tiling: big 8-aligned tiles; cap at ~half the batch for moderate B
    # so the grid has >= 2 "parallel" steps and v7x's two TensorCores both run.
    batch_tile = _round_up(batch_tile, 8)
    b8 = _round_up(B, 8)
    bt = min(batch_tile, b8)
    if b8 > 64:
        bt = min(bt, _round_up(-(-b8 // 2), 8))
    b_pad = _round_up(B, bt)
    if b_pad != B:   # batch-axis zero rows only (tiny; sliced off at the end)
        x = jnp.pad(x, ((0, b_pad - B), (0, 0)))

    grid = (b_pad // bt,)
    const = lambda r, c: pl.BlockSpec((r, c), lambda i: (0, 0))

    out = pl.pallas_call(
        functools.partial(_disc_kernel, in_dim=in_dim),
        out_shape=jax.ShapeDtypeStruct((b_pad, 1), jnp.float32),
        grid_spec=pltpu.PrefetchScalarGridSpec(
            num_scalar_prefetch=0,
            grid=grid,
            in_specs=[
                pl.BlockSpec((bt, in_dim), lambda i: (i, 0)),  # merged x (unpadded lanes)
                const(4, k_pad),        # [mean, inv_std, clamp_lo, clamp_hi]
                const(k_pad, h0_p),     # fused W1 (f32)
                const(1, h0_p),         # b1
                const(h0_p, h1_p),      # W2
                const(1, h1_p),         # b2
                const(1, h1_p),         # W3 row (head weight)
                const(1, 1),            # b3
            ],
            out_specs=pl.BlockSpec((bt, 1), lambda i: (i, 0)),
            scratch_shapes=[pltpu.VMEM((bt, k_pad), jnp.float32)],  # lane zero-fill
        ),
        compiler_params=pltpu.CompilerParams(
            dimension_semantics=("parallel",)),   # batch axis -> v7x 2-TC split
    )(x, prep["stats"], prep["w1"], prep["b1"], prep["w2"], prep["b2"],
      prep["w3_row"], prep["b3"])

    return out[:B]


def _orthogonal(key, shape):
    """Deterministic orthogonal init (same semantics as nn.init.orthogonal_)."""
    rows, cols = shape
    n = max(rows, cols)
    a = jax.random.normal(key, (n, n), dtype=jnp.float32)
    q, r = jnp.linalg.qr(a)
    q = q * jnp.sign(jnp.diag(r))[None, :]
    return q[:rows, :cols]


def make_params(key, ob_dim, ac_dim, hid_dims):
    in_dim = ob_dim + ac_dim   # state_only=False, wrap_absorb=False
    k1, k2, k3, k4, k5 = jax.random.split(key, 5)
    return {
        "w1": _orthogonal(k1, (hid_dims[0], in_dim)),
        "b1": jnp.zeros((hid_dims[0],), jnp.float32),
        "w2": _orthogonal(k2, (hid_dims[1], hid_dims[0])),
        "b2": jnp.zeros((hid_dims[1],), jnp.float32),
        "w3": _orthogonal(k3, (1, hid_dims[1])),
        "b3": jnp.zeros((1,), jnp.float32),
        # deterministic running-moments stats for the standardization path
        "rms_mean": 0.1 * jax.random.normal(k4, (1, ob_dim), jnp.float32),
        "rms_std": 1.0 + 0.2 * jax.nn.sigmoid(
            jax.random.normal(k5, (1, ob_dim), jnp.float32)),
    }


def reference_forward(input_a, input_b, params):
    a = (input_a - params["rms_mean"]) / params["rms_std"]
    a = jnp.clip(a, *STANDARDIZED_OB_CLAMPS)
    x = jnp.concatenate([a, input_b], axis=-1)
    x = jax.nn.leaky_relu(x @ params["w1"].T + params["b1"], LEAKY_SLOPE)
    x = jax.nn.leaky_relu(x @ params["w2"].T + params["b2"], LEAKY_SLOPE)
    return x @ params["w3"].T + params["b3"]


if __name__ == "__main__":
    key = jax.random.PRNGKey(0)
    k_par, k_a, k_b = jax.random.split(key, 3)

    # small, deliberately "awkward" shapes: non-multiple batch and odd feature
    # dims exercise the padding paths; batch_tile=64 exercises a multi-step grid
    # (and the v7x >=2-step cap).
    B, ob_dim, ac_dim, hid_dims = 200, 17, 6, (32, 32)
    params = make_params(k_par, ob_dim, ac_dim, hid_dims)
    prep = prepare_params(params, ob_dim, ac_dim)

    input_a = jax.random.normal(k_a, (B, ob_dim), jnp.float32)
    input_b = jax.random.normal(k_b, (B, ac_dim), jnp.float32)

    fwd = jax.jit(functools.partial(discriminator_forward, prep=prep,
                                    batch_tile=64))
    out = jax.block_until_ready(fwd(input_a, input_b))

    ref = reference_forward(input_a, input_b, params)
    assert out.shape == (B, 1), out.shape
    # f32 weights + HIGHEST matmul precision -> near-parity with the f32
    # reference; tolerance left with ample margin for MXU pass decomposition.
    assert jnp.allclose(out, ref, atol=1e-2, rtol=1e-2), (
        float(jnp.max(jnp.abs(out - ref))))

    print("KERNEL_OK")
</pallas_src>

<mosaic_0001>
module attributes {stable_mosaic.version = 11 : i64} {
  func.func @_disc_kernel(%arg0: i32, %arg1: memref<64x23xf32, #tpu.memory_space<vmem>>, %arg2: memref<4x128xf32, #tpu.memory_space<vmem>>, %arg3: memref<128x128xf32, #tpu.memory_space<vmem>>, %arg4: memref<1x128xf32, #tpu.memory_space<vmem>>, %arg5: memref<128x128xf32, #tpu.memory_space<vmem>>, %arg6: memref<1x128xf32, #tpu.memory_space<vmem>>, %arg7: memref<1x128xf32, #tpu.memory_space<vmem>>, %arg8: memref<1x1xf32, #tpu.memory_space<vmem>>, %arg9: memref<64x1xf32, #tpu.memory_space<vmem>>, %arg10: memref<64x128xf32, #tpu.memory_space<vmem>>) attributes {dimension_semantics = [#tpu.dimension_semantics<parallel>], iteration_bounds = array<i64: 4>, scalar_prefetch = 0 : i64, scratch_operands = 1 : i64, tpu.core_type = #tpu.core_type<tc>, window_params = [{transform_indices = @transform_0, window_bounds = array<i64: 64, 23>}, {pipeline_mode = #tpu.pipeline_mode<synchronous>, transform_indices = @transform_1, window_bounds = array<i64: 4, 128>}, {pipeline_mode = #tpu.pipeline_mode<synchronous>, transform_indices = @transform_2, window_bounds = array<i64: 128, 128>}, {pipeline_mode = #tpu.pipeline_mode<synchronous>, transform_indices = @transform_3, window_bounds = array<i64: 1, 128>}, {pipeline_mode = #tpu.pipeline_mode<synchronous>, transform_indices = @transform_4, window_bounds = array<i64: 128, 128>}, {pipeline_mode = #tpu.pipeline_mode<synchronous>, transform_indices = @transform_5, window_bounds = array<i64: 1, 128>}, {pipeline_mode = #tpu.pipeline_mode<synchronous>, transform_indices = @transform_6, window_bounds = array<i64: 1, 128>}, {pipeline_mode = #tpu.pipeline_mode<synchronous>, transform_indices = @transform_7, window_bounds = array<i64: 1, 1>}, {transform_indices = @transform_8, window_bounds = array<i64: 64, 1>}]} {
    %cst = arith.constant 0.000000e+00 : f32
    %0 = vector.broadcast %cst : f32 to vector<64x128xf32>
    %c0 = arith.constant 0 : index
    %c0_0 = arith.constant 0 : index
    %1 = vector.load %arg10[%c0, %c0_0] : memref<64x128xf32, #tpu.memory_space<vmem>>, vector<64x128xf32>
    tpu.vector_store %arg10[%c0, %c0_0], %0 {strides = array<i32>} : memref<64x128xf32, #tpu.memory_space<vmem>>, vector<64x128xf32>,
    %c0_1 = arith.constant 0 : index
    %c0_2 = arith.constant 0 : index
    %2 = vector.load %arg1[%c0_1, %c0_2] : memref<64x23xf32, #tpu.memory_space<vmem>>, vector<64x23xf32>
    %c0_3 = arith.constant 0 : index
    %c0_4 = arith.constant 0 : index
    %3 = vector.load %arg10[%c0_3, %c0_4] : memref<64x128xf32, #tpu.memory_space<vmem>>, vector<64x23xf32>
    tpu.vector_store %arg10[%c0_3, %c0_4], %2 {strides = array<i32>} : memref<64x128xf32, #tpu.memory_space<vmem>>, vector<64x23xf32>,
    %c0_5 = arith.constant 0 : index
    %c0_6 = arith.constant 0 : index
    %4 = vector.load %arg2[%c0_5, %c0_6] : memref<4x128xf32, #tpu.memory_space<vmem>>, vector<1x128xf32>
    %c1 = arith.constant 1 : index
    %c0_7 = arith.constant 0 : index
    %5 = vector.load %arg2[%c1, %c0_7] : memref<4x128xf32, #tpu.memory_space<vmem>>, vector<1x128xf32>
    %c2 = arith.constant 2 : index
    %c0_8 = arith.constant 0 : index
    %6 = vector.load %arg2[%c2, %c0_8] : memref<4x128xf32, #tpu.memory_space<vmem>>, vector<1x128xf32>
    %c3 = arith.constant 3 : index
    %c0_9 = arith.constant 0 : index
    %7 = vector.load %arg2[%c3, %c0_9] : memref<4x128xf32, #tpu.memory_space<vmem>>, vector<1x128xf32>
    %c0_10 = arith.constant 0 : index
    %c0_11 = arith.constant 0 : index
    %8 = vector.load %arg10[%c0_10, %c0_11] : memref<64x128xf32, #tpu.memory_space<vmem>>, vector<64x128xf32>
    %9 = vector.broadcast %4 : vector<1x128xf32> to vector<64x128xf32>
    %10 = arith.subf %8, %9 : vector<64x128xf32>
    %11 = vector.broadcast %5 : vector<1x128xf32> to vector<64x128xf32>
    %12 = arith.mulf %10, %11 : vector<64x128xf32>
    %13 = vector.broadcast %6 : vector<1x128xf32> to vector<64x128xf32>
    %14 = arith.maximumf %13, %12 : vector<64x128xf32>
    %15 = vector.broadcast %7 : vector<1x128xf32> to vector<64x128xf32>
    %16 = arith.minimumf %15, %14 : vector<64x128xf32>
    %c0_12 = arith.constant 0 : index
    %c0_13 = arith.constant 0 : index
    %17 = vector.load %arg3[%c0_12, %c0_13] : memref<128x128xf32, #tpu.memory_space<vmem>>, vector<128x128xf32>
    %cst_14 = arith.constant dense<0.000000e+00> : vector<64x128xf32>
    %18 = tpu.matmul %16, %17, %cst_14 {dimension_numbers = #tpu.dot_dimension_numbers<[1], [0], [0], [1], [0, 0, 1, 1], [], []>, precision = #tpu.contract_precision<fp32>} : vector<64x128xf32>, vector<128x128xf32>, vector<64x128xf32> -> vector<64x128xf32>
    %c0_15 = arith.constant 0 : index
    %c0_16 = arith.constant 0 : index
    %19 = vector.load %arg4[%c0_15, %c0_16] : memref<1x128xf32, #tpu.memory_space<vmem>>, vector<1x128xf32>
    %20 = vector.broadcast %19 : vector<1x128xf32> to vector<64x128xf32>
    %21 = arith.addf %18, %20 : vector<64x128xf32>
    %cst_17 = arith.constant 0.000000e+00 : f32
    %22 = vector.broadcast %cst_17 : f32 to vector<64x128xf32>
    %23 = arith.cmpf oge, %21, %22 : vector<64x128xf32>
    %cst_18 = arith.constant 1.000000e-01 : f32
    %24 = vector.broadcast %cst_18 : f32 to vector<64x128xf32>
    %25 = arith.mulf %24, %21 : vector<64x128xf32>
    %26 = arith.select %23, %21, %25 : vector<64x128xi1>, vector<64x128xf32>
    %c0_19 = arith.constant 0 : index
    %c0_20 = arith.constant 0 : index
    %27 = vector.load %arg5[%c0_19, %c0_20] : memref<128x128xf32, #tpu.memory_space<vmem>>, vector<128x128xf32>
    %cst_21 = arith.constant dense<0.000000e+00> : vector<64x128xf32>
    %28 = tpu.matmul %26, %27, %cst_21 {dimension_numbers = #tpu.dot_dimension_numbers<[1], [0], [0], [1], [0, 0, 1, 1], [], []>, precision = #tpu.contract_precision<fp32>} : vector<64x128xf32>, vector<128x128xf32>, vector<64x128xf32> -> vector<64x128xf32>
    %c0_22 = arith.constant 0 : index
    %c0_23 = arith.constant 0 : index
    %29 = vector.load %arg6[%c0_22, %c0_23] : memref<1x128xf32, #tpu.memory_space<vmem>>, vector<1x128xf32>
    %30 = vector.broadcast %29 : vector<1x128xf32> to vector<64x128xf32>
    %31 = arith.addf %28, %30 : vector<64x128xf32>
    %cst_24 = arith.constant 0.000000e+00 : f32
    %32 = vector.broadcast %cst_24 : f32 to vector<64x128xf32>
    %33 = arith.cmpf oge, %31, %32 : vector<64x128xf32>
    %cst_25 = arith.constant 1.000000e-01 : f32
    %34 = vector.broadcast %cst_25 : f32 to vector<64x128xf32>
    %35 = arith.mulf %34, %31 : vector<64x128xf32>
    %36 = arith.select %33, %31, %35 : vector<64x128xi1>, vector<64x128xf32>
    %c0_26 = arith.constant 0 : index
    %c0_27 = arith.constant 0 : index
    %37 = vector.load %arg7[%c0_26, %c0_27] : memref<1x128xf32, #tpu.memory_space<vmem>>, vector<1x128xf32>
    %38 = vector.broadcast %37 : vector<1x128xf32> to vector<64x128xf32>
    %39 = arith.mulf %36, %38 : vector<64x128xf32>
    %cst_28 = arith.constant dense<0.000000e+00> : vector<64xf32>
    %40 = vector.multi_reduction <add>, %39, %cst_28 [1] : vector<64x128xf32> to vector<64xf32>
    %41 = vector.shape_cast %40 : vector<64xf32> to vector<64x1xf32>
    %c0_29 = arith.constant 0 : index
    %c0_30 = arith.constant 0 : index
    %42 = vector.load %arg8[%c0_29, %c0_30] : memref<1x1xf32, #tpu.memory_space<vmem>>, vector<1x1xf32>
    %43 = vector.broadcast %42 : vector<1x1xf32> to vector<64x1xf32>
    %44 = arith.addf %41, %43 : vector<64x1xf32>
    %c0_31 = arith.constant 0 : index
    %c0_32 = arith.constant 0 : index
    %45 = vector.load %arg9[%c0_31, %c0_32] : memref<64x1xf32, #tpu.memory_space<vmem>>, vector<64x1xf32>
    tpu.vector_store %arg9[%c0_31, %c0_32], %44 {strides = array<i32>} : memref<64x1xf32, #tpu.memory_space<vmem>>, vector<64x1xf32>,
    return
  }
  func.func @transform_0(%arg0: i32) -> (i32, i32) {
    %c0_i32 = arith.constant 0 : i32
    %c0_i32_0 = arith.constant 0 : i32
    return %arg0, %c0_i32 : i32, i32
  }
  func.func @transform_1(%arg0: i32) -> (i32, i32) {
    %c0_i32 = arith.constant 0 : i32
    %c0_i32_0 = arith.constant 0 : i32
    %c0_i32_1 = arith.constant 0 : i32
    return %c0_i32, %c0_i32_0 : i32, i32
  }
  func.func @transform_2(%arg0: i32) -> (i32, i32) {
    %c0_i32 = arith.constant 0 : i32
    %c0_i32_0 = arith.constant 0 : i32
    %c0_i32_1 = arith.constant 0 : i32
    return %c0_i32, %c0_i32_0 : i32, i32
  }
  func.func @transform_3(%arg0: i32) -> (i32, i32) {
    %c0_i32 = arith.constant 0 : i32
    %c0_i32_0 = arith.constant 0 : i32
    %c0_i32_1 = arith.constant 0 : i32
    return %c0_i32, %c0_i32_0 : i32, i32
  }
  func.func @transform_4(%arg0: i32) -> (i32, i32) {
    %c0_i32 = arith.constant 0 : i32
    %c0_i32_0 = arith.constant 0 : i32
    %c0_i32_1 = arith.constant 0 : i32
    return %c0_i32, %c0_i32_0 : i32, i32
  }
  func.func @transform_5(%arg0: i32) -> (i32, i32) {
    %c0_i32 = arith.constant 0 : i32
    %c0_i32_0 = arith.constant 0 : i32
    %c0_i32_1 = arith.constant 0 : i32
    return %c0_i32, %c0_i32_0 : i32, i32
  }
  func.func @transform_6(%arg0: i32) -> (i32, i32) {
    %c0_i32 = arith.constant 0 : i32
    %c0_i32_0 = arith.constant 0 : i32
    %c0_i32_1 = arith.constant 0 : i32
    return %c0_i32, %c0_i32_0 : i32, i32
  }
  func.func @transform_7(%arg0: i32) -> (i32, i32) {
    %c0_i32 = arith.constant 0 : i32
    %c0_i32_0 = arith.constant 0 : i32
    %c0_i32_1 = arith.constant 0 : i32
    return %c0_i32, %c0_i32_0 : i32, i32
  }
  func.func @transform_8(%arg0: i32) -> (i32, i32) {
    %c0_i32 = arith.constant 0 : i32
    %c0_i32_0 = arith.constant 0 : i32
    return %arg0, %c0_i32 : i32, i32
  }
}

</mosaic_0001>

<llo_original>
// kernel: discriminator_forward.1
$region0: #{discriminator_forward.1}
  #allocation0 [shape = 'u32[]', space=smem, size = 0x4, offset = 0x4, fixed_abs, tag = 'smem constant byte address 0x4 - core index']
  #allocation1 [shape = 'u32[144,128]{1,0:T(1,128)}', space=vmem, size = 0x12000, scoped, tag = 'internal scratch']
  #allocation2 [shape = 'f32[64,128]{1,0:T(8,128)}', space=vmem, size = 0x8000, scoped, tag = 'scratch operand']
  #allocation3 [shape = 'f32[1,1]{1,0:T(1,128)S(1)}', space=vmem, size = 0x200, scoped, tag = 'scoped memory for discriminator_forward.1']
  %s0 = inlined_call_operand.vmem [shape: f32[256,23], index: 0, kind: input, shape index: {}]
  %s1 = inlined_call_operand.vmem [shape: f32[4,128], index: 1, kind: input, shape index: {}]
  %s2 = inlined_call_operand.vmem [shape: f32[128,128], index: 2, kind: input, shape index: {}]
  %s3 = inlined_call_operand.vmem [shape: f32[1,128], index: 3, kind: input, shape index: {}, may-alias: {3,5}]
  %s4 = inlined_call_operand.vmem [shape: f32[128,128], index: 4, kind: input, shape index: {}]
  %s5 = inlined_call_operand.vmem [shape: f32[1,128], index: 5, kind: input, shape index: {}, may-alias: {3,5}]
  %s6 = inlined_call_operand.vmem [shape: f32[1,128], index: 6, kind: input, shape index: {}]
  %s7 = inlined_call_operand.<no memory space> [shape: f32[1,1], index: 7, kind: input, shape index: {}]
  %s8 = inlined_call_operand.vmem [shape: f32[256,1], index: 8, kind: output, shape index: {}]
  %s9 = sld [smem:[#allocation0]]
  $region65: #{discriminator_forward.1} parent=0
    _
  %s11 = ssub.s32 1, %s9
  %s12 = scalar_select 0, %s11, %s9
  %v13 = vstv %s7
  %14 = vst [vmem:[#allocation3] sm:$0x1] %v13
  loop: start=0, step=1, limit=6
  $region2: #{discriminator_forward.1} parent=0 // loop_pre_header
    _
  $region3: #{discriminator_forward.1} parent=0 // loop_header
    %s16 = sphi 0, %s20
    %p17 = scmp.ge.s32.totalorder %s16, 6
    %s26 = sphi 0, %s28
    %s29 = sphi 0, %s26
    %s30 = sphi 0, %s29
    %s46 = sphi 0, %s30
    %s50 = sphi 0, %s50
    %s52 = sphi 0, %s50
    %s53 = sphi 0, %s52
    %s67 = sphi 0, %s53
    %s71 = sphi 0, %s71
    %s73 = sphi 0, %s71
    %s74 = sphi 0, %s73
    %s88 = sphi 0, %s74
    %s92 = sphi 0, %s92
    %s94 = sphi 0, %s92
    %s95 = sphi 0, %s94
    %s109 = sphi 0, %s95
    %s113 = sphi 0, %s113
    %s115 = sphi 0, %s113
    %s116 = sphi 0, %s115
    %s130 = sphi 0, %s116
    %s134 = sphi 0, %s134
    %s136 = sphi 0, %s134
    %s137 = sphi 0, %s136
    %s151 = sphi 0, %s137
    %s155 = sphi 0, %s155
    %s157 = sphi 0, %s155
    %s158 = sphi 0, %s157
    %s172 = sphi 0, %s158
    %s176 = sphi 0, %s176
    %s178 = sphi 0, %s176
    %s179 = sphi 0, %s178
    %s193 = sphi 0, %s179
    %s199 = sphi 0, %s201
    %s202 = sphi 0, %s199
    %s203 = sphi 0, %s202
    %s219 = sphi 0, %s203
  $region4: #{discriminator_forward.1} parent=0 // loop_header_branch
    %19 = sbr.rel (%p17) target = $region8
  $region5: #{discriminator_forward.1} parent=0 // loop_body
    %s21 = ssub.s32 %s16, 1
    %s22 = ssub.s32 %s16, 2
    %s23 = sadd.s32 %s16, 1
    %s24 = ssub.s32 %s16, %s23
    %p25 = scmp.eq.s32.totalorder %s24, 0
    %s27 = sadd.s32 %s26, 1
    %s28 = scalar_select %p25, %s26, %s27
    %p31 = pneg %p25
    %p32 = scmp.eq.s32.totalorder %s16, 3
    %p33 = por %p31, %p32
    %p34 = scmp.ne.s32.totalorder %s26, %s29
    %p35 = scmp.eq.s32.totalorder %s16, 0
    %p36 = por %p34, %p35
    %p37 = scmp.ne.s32.totalorder %s26, %s29
    %p38 = scmp.eq.s32.totalorder %s21, 3
    %p39 = por %p37, %p38
    %p40 = scmp.ne.s32.totalorder %s29, %s30
    %p41 = scmp.eq.s32.totalorder %s21, 0
    %p42 = por %p40, %p41
    %p43 = scmp.ne.s32.totalorder %s29, %s30
    %p44 = scmp.eq.s32.totalorder %s22, 3
    %p45 = por %p43, %p44
    %p47 = scmp.ne.s32.totalorder %s30, %s46
    %p48 = scmp.eq.s32.totalorder %s22, 0
    %p49 = por %p47, %p48
    %s51 = sadd.s32 %s50, 1
    %p54 = scmp.eq.s32.totalorder %s16, 3
    %p55 = scmp.ne.s32.totalorder %s50, %s52
    %p56 = scmp.eq.s32.totalorder %s16, 0
    %p57 = por %p55, %p56
    %p58 = scmp.ne.s32.totalorder %s50, %s52
    %p59 = scmp.eq.s32.totalorder %s21, 3
    %p60 = por %p58, %p59
    %p61 = scmp.ne.s32.totalorder %s52, %s53
    %p62 = scmp.eq.s32.totalorder %s21, 0
    %p63 = por %p61, %p62
    %p64 = scmp.ne.s32.totalorder %s52, %s53
    %p65 = scmp.eq.s32.totalorder %s22, 3
    %p66 = por %p64, %p65
    %p68 = scmp.ne.s32.totalorder %s53, %s67
    %p69 = scmp.eq.s32.totalorder %s22, 0
    %p70 = por %p68, %p69
    %s72 = sadd.s32 %s71, 1
    %p75 = scmp.eq.s32.totalorder %s16, 3
    %p76 = scmp.ne.s32.totalorder %s71, %s73
    %p77 = scmp.eq.s32.totalorder %s16, 0
    %p78 = por %p76, %p77
    %p79 = scmp.ne.s32.totalorder %s71, %s73
    %p80 = scmp.eq.s32.totalorder %s21, 3
    %p81 = por %p79, %p80
    %p82 = scmp.ne.s32.totalorder %s73, %s74
    %p83 = scmp.eq.s32.totalorder %s21, 0
    %p84 = por %p82, %p83
    %p85 = scmp.ne.s32.totalorder %s73, %s74
    %p86 = scmp.eq.s32.totalorder %s22, 3
    %p87 = por %p85, %p86
    %p89 = scmp.ne.s32.totalorder %s74, %s88
    %p90 = scmp.eq.s32.totalorder %s22, 0
    %p91 = por %p89, %p90
    %s93 = sadd.s32 %s92, 1
    %p96 = scmp.eq.s32.totalorder %s16, 3
    %p97 = scmp.ne.s32.totalorder %s92, %s94
    %p98 = scmp.eq.s32.totalorder %s16, 0
    %p99 = por %p97, %p98
    %p100 = scmp.ne.s32.totalorder %s92, %s94
    %p101 = scmp.eq.s32.totalorder %s21, 3
    %p102 = por %p100, %p101
    %p103 = scmp.ne.s32.totalorder %s94, %s95
    %p104 = scmp.eq.s32.totalorder %s21, 0
    %p105 = por %p103, %p104
    %p106 = scmp.ne.s32.totalorder %s94, %s95
    %p107 = scmp.eq.s32.totalorder %s22, 3
    %p108 = por %p106, %p107
    %p110 = scmp.ne.s32.totalorder %s95, %s109
    %p111 = scmp.eq.s32.totalorder %s22, 0
    %p112 = por %p110, %p111
    %s114 = sadd.s32 %s113, 1
    %p117 = scmp.eq.s32.totalorder %s16, 3
    %p118 = scmp.ne.s32.totalorder %s113, %s115
    %p119 = scmp.eq.s32.totalorder %s16, 0
    %p120 = por %p118, %p119
    %p121 = scmp.ne.s32.totalorder %s113, %s115
    %p122 = scmp.eq.s32.totalorder %s21, 3
    %p123 = por %p121, %p122
    %p124 = scmp.ne.s32.totalorder %s115, %s116
    %p125 = scmp.eq.s32.totalorder %s21, 0
    %p126 = por %p124, %p125
    %p127 = scmp.ne.s32.totalorder %s115, %s116
    %p128 = scmp.eq.s32.totalorder %s22, 3
    %p129 = por %p127, %p128
    %p131 = scmp.ne.s32.totalorder %s116, %s130
    %p132 = scmp.eq.s32.totalorder %s22, 0
    %p133 = por %p131, %p132
    %s135 = sadd.s32 %s134, 1
    %p138 = scmp.eq.s32.totalorder %s16, 3
    %p139 = scmp.ne.s32.totalorder %s134, %s136
    %p140 = scmp.eq.s32.totalorder %s16, 0
    %p141 = por %p139, %p140
    %p142 = scmp.ne.s32.totalorder %s134, %s136
    %p143 = scmp.eq.s32.totalorder %s21, 3
    %p144 = por %p142, %p143
    %p145 = scmp.ne.s32.totalorder %s136, %s137
    %p146 = scmp.eq.s32.totalorder %s21, 0
    %p147 = por %p145, %p146
    %p148 = scmp.ne.s32.totalorder %s136, %s137
    %p149 = scmp.eq.s32.totalorder %s22, 3
    %p150 = por %p148, %p149
    %p152 = scmp.ne.s32.totalorder %s137, %s151
    %p153 = scmp.eq.s32.totalorder %s22, 0
    %p154 = por %p152, %p153
    %s156 = sadd.s32 %s155, 1
    %p159 = scmp.eq.s32.totalorder %s16, 3
    %p160 = scmp.ne.s32.totalorder %s155, %s157
    %p161 = scmp.eq.s32.totalorder %s16, 0
    %p162 = por %p160, %p161
    %p163 = scmp.ne.s32.totalorder %s155, %s157
    %p164 = scmp.eq.s32.totalorder %s21, 3
    %p165 = por %p163, %p164
    %p166 = scmp.ne.s32.totalorder %s157, %s158
    %p167 = scmp.eq.s32.totalorder %s21, 0
    %p168 = por %p166, %p167
    %p169 = scmp.ne.s32.totalorder %s157, %s158
    %p170 = scmp.eq.s32.totalorder %s22, 3
    %p171 = por %p169, %p170
    %p173 = scmp.ne.s32.totalorder %s158, %s172
    %p174 = scmp.eq.s32.totalorder %s22, 0
    %p175 = por %p173, %p174
    %s177 = sadd.s32 %s176, 1
    %p180 = scmp.eq.s32.totalorder %s16, 3
    %p181 = scmp.ne.s32.totalorder %s176, %s178
    %p182 = scmp.eq.s32.totalorder %s16, 0
    %p183 = por %p181, %p182
    %p184 = scmp.ne.s32.totalorder %s176, %s178
    %p185 = scmp.eq.s32.totalorder %s21, 3
    %p186 = por %p184, %p185
    %p187 = scmp.ne.s32.totalorder %s178, %s179
    %p188 = scmp.eq.s32.totalorder %s21, 0
    %p189 = por %p187, %p188
    %p190 = scmp.ne.s32.totalorder %s178, %s179
    %p191 = scmp.eq.s32.totalorder %s22, 3
    %p192 = por %p190, %p191
    %p194 = scmp.ne.s32.totalorder %s179, %s193
    %p195 = scmp.eq.s32.totalorder %s22, 0
    %p196 = por %p194, %p195
    %s197 = ssub.s32 %s16, %s23
    %p198 = scmp.eq.s32.totalorder %s197, 0
    %s200 = sadd.s32 %s199, 1
    %s201 = scalar_select %p198, %s199, %s200
    %p204 = pneg %p198
    %p205 = scmp.eq.s32.totalorder %s16, 3
    %p206 = por %p204, %p205
    %p207 = scmp.ne.s32.totalorder %s199, %s202
    %p208 = scmp.eq.s32.totalorder %s16, 0
    %p209 = por %p207, %p208
    %p210 = scmp.ne.s32.totalorder %s199, %s202
    %p211 = scmp.eq.s32.totalorder %s21, 3
    %p212 = por %p210, %p211
    %p213 = scmp.ne.s32.totalorder %s202, %s203
    %p214 = scmp.eq.s32.totalorder %s21, 0
    %p215 = por %p213, %p214
    %p216 = scmp.ne.s32.totalorder %s202, %s203
    %p217 = scmp.eq.s32.totalorder %s22, 3
    %p218 = por %p216, %p217
    %p220 = scmp.ne.s32.totalorder %s203, %s219
    %p221 = scmp.eq.s32.totalorder %s22, 0
    %p222 = por %p220, %p221
    %p223 = scmp.le.s32.totalorder 1, %s16
    %p224 = scmp.lt.s32.totalorder %s16, 5
    %p225 = pnand %p223, %p224
    %p226 = pneg %p225
    // Predicated region
    $region9: #{discriminator_forward.1} parent=5 // pred_check
      _
    $region10: #{discriminator_forward.1} parent=5 // pred_check_branch
      %228 = sbr.rel (%p225) target = $region12
    $region11: #{discriminator_forward.1} parent=5 // pred_region
      %s229 = ssub.s32 %s16, 1
      // Predicated region
      $region13: #{discriminator_forward.1} parent=11 // pred_check
        %p230 = pneg %p63
      $region14: #{discriminator_forward.1} parent=11 // pred_check_branch
        %232 = sbr.rel (%p230) target = $region16
      $region15: #{discriminator_forward.1} parent=11 // pred_region
        _
      $region16: #{discriminator_forward.1} parent=11 // pred_fallthru
        _
      // Predicated region
      $region17: #{discriminator_forward.1} parent=11 // pred_check
        %p233 = pneg %p84
      $region18: #{discriminator_forward.1} parent=11 // pred_check_branch
        %235 = sbr.rel (%p233) target = $region20
      $region19: #{discriminator_forward.1} parent=11 // pred_region
        _
      $region20: #{discriminator_forward.1} parent=11 // pred_fallthru
        _
      // Predicated region
      $region21: #{discriminator_forward.1} parent=11 // pred_check
        %p236 = pneg %p105
      $region22: #{discriminator_forward.1} parent=11 // pred_check_branch
        %238 = sbr.rel (%p236) target = $region24
      $region23: #{discriminator_forward.1} parent=11 // pred_region
        _
      $region24: #{discriminator_forward.1} parent=11 // pred_fallthru
        _
      // Predicated region
      $region25: #{discriminator_forward.1} parent=11 // pred_check
        %p239 = pneg %p126
      $region26: #{discriminator_forward.1} parent=11 // pred_check_branch
        %241 = sbr.rel (%p239) target = $region28
      $region27: #{discriminator_forward.1} parent=11 // pred_region
        _
      $region28: #{discriminator_forward.1} parent=11 // pred_fallthru
        _
      // Predicated region
      $region29: #{discriminator_forward.1} parent=11 // pred_check
        %p242 = pneg %p147
      $region30: #{discriminator_forward.1} parent=11 // pred_check_branch
        %244 = sbr.rel (%p242) target = $region32
      $region31: #{discriminator_forward.1} parent=11 // pred_region
        _
      $region32: #{discriminator_forward.1} parent=11 // pred_fallthru
        _
      // Predicated region
      $region33: #{discriminator_forward.1} parent=11 // pred_check
        %p245 = pneg %p168
      $region34: #{discriminator_forward.1} parent=11 // pred_check_branch
        %247 = sbr.rel (%p245) target = $region36
      $region35: #{discriminator_forward.1} parent=11 // pred_region
        _
      $region36: #{discriminator_forward.1} parent=11 // pred_fallthru
        _
      // Predicated region
      $region37: #{discriminator_forward.1} parent=11 // pred_check
        %p248 = pneg %p189
      $region38: #{discriminator_forward.1} parent=11 // pred_check_branch
        %250 = sbr.rel (%p248) target = $region40
      $region39: #{discriminator_forward.1} parent=11 // pred_region
        _
      $region40: #{discriminator_forward.1} parent=11 // pred_fallthru
        _
    $region12: #{discriminator_forward.1} parent=5 // pred_fallthru
      _
    %p251 = scmp.lt.s32.totalorder %s16, 4
    // Predicated region
    $region41: #{discriminator_forward.1} parent=5 // pred_check
      %p252 = pneg %p251
    $region42: #{discriminator_forward.1} parent=5 // pred_check_branch
      %254 = sbr.rel (%p252) target = $region44
    $region43: #{discriminator_forward.1} parent=5 // pred_region
      // Predicated region
      $region45: #{discriminator_forward.1} parent=43 // pred_check
        %p255 = pneg %p36
      $region46: #{discriminator_forward.1} parent=43 // pred_check_branch
        %257 = sbr.rel (%p255) target = $region48
      $region47: #{discriminator_forward.1} parent=43 // pred_region
        %s258 = smul.u32 8, %s16
        %p259 = scmp.lt.s32.totalorder %s258, 31
        %s260 = scalar_select %p259, %s258, 31
        %s261 = smul.addr %s260, 8
        %s262 = scalar_lea.vmem %s0, %s261
        %s263 = smul.u32 8, %s16
      $region48: #{discriminator_forward.1} parent=43 // pred_fallthru
        _
    $region44: #{discriminator_forward.1} parent=5 // pred_fallthru
      _
    %p264 = scmp.le.s32.totalorder 1, %s16
    %p265 = scmp.lt.s32.totalorder %s16, 5
    %p266 = pnand %p264, %p265
    %p267 = pneg %p266
    // Predicated region
    $region49: #{discriminator_forward.1} parent=5 // pred_check
      _
    $region50: #{discriminator_forward.1} parent=5 // pred_check_branch
      %269 = sbr.rel (%p266) target = $region52
    $region51: #{discriminator_forward.1} parent=5 // pred_region
      %s270 = ssub.s32 %s16, 1
      %s271 = smul.u32 8, %s21
      %p272 = scmp.lt.s32.totalorder %s271, 31
      %s273 = scalar_select %p272, %s271, 31
      %s274 = smul.addr %s273, 8
      %s275 = scalar_lea.vmem %s0, %s274
      %p276 = pneg %p42
      %p277 = pneg %p39
      %p278 = pneg %p63
      %p279 = pneg %p60
      %p280 = pneg %p84
      %p281 = pneg %p81
      %p282 = pneg %p105
      %p283 = pneg %p102
      %p284 = pneg %p126
      %p285 = pneg %p123
      %p286 = pneg %p147
      %p287 = pneg %p144
      %p288 = pneg %p168
      %p289 = pneg %p165
      %p290 = pneg %p189
      %p291 = pneg %p186
      %p292 = pneg %p215
      %p293 = pneg %p212
      %s294 = smul.u32 8, %s21
      %p295 = scmp.lt.s32.totalorder %s294, 31
      %s296 = scalar_select %p295, %s294, 31
      %s297 = smul.addr %s296, 8
      %s298 = scalar_lea.vmem %s8, %s297
      %s299 = smul.u32 8, %s21
      %p300 = scmp.lt.s32.totalorder %s299, 31
      %s301 = scalar_select %p300, %s299, 31
      %s302 = smul.addr %s301, 8
      %s303 = scalar_lea.vmem %s0, %s302
      %s304 = smul.u32 8, %s21
      %s305 = smul.u32 8, %s21
      %p306 = scmp.lt.s32.totalorder %s305, 31
      %s307 = scalar_select %p306, %s305, 31
      %s308 = smul.addr %s307, 8
      %s309 = scalar_lea.vmem %s8, %s308
      %s310 = smul.u32 8, %s21
      %311 = vst [vmem:[#allocation2] sm:$0xff] 0.0
      %312 = vst [vmem:[#allocation2 + $0x8] sm:$0xff] 0.0
      %313 = vst [vmem:[#allocation2 + $0x10] sm:$0xff] 0.0
      %314 = vst [vmem:[#allocation2 + $0x18] sm:$0xff] 0.0
      %315 = vst [vmem:[#allocation2 + $0x20] sm:$0xff] 0.0
      %316 = vst [vmem:[#allocation2 + $0x28] sm:$0xff] 0.0
      %317 = vst [vmem:[#allocation2 + $0x30] sm:$0xff] 0.0
      %318 = vst [vmem:[#allocation2 + $0x38] sm:$0xff] 0.0
      %v319 = vld [vmem:[%s303] sm:$0xff]
      %v320 = vld [vmem:[%s303 + $0x8] sm:$0xff]
      %v321 = vld [vmem:[%s303 + $0x10] sm:$0xff]
      %v322 = vld [vmem:[%s303 + $0x18] sm:$0xff]
      %v323 = vld [vmem:[%s303 + $0x20] sm:$0xff]
      %v324 = vld [vmem:[%s303 + $0x28] sm:$0xff]
      %v325 = vld [vmem:[%s303 + $0x30] sm:$0xff]
      %v326 = vld [vmem:[%s303 + $0x38] sm:$0xff]
      %vm327 = vcmask 187392
      %328 = vst.msk [vmem:[#allocation2] sm:$0xff] %vm327, %v319
      %329 = vst.msk [vmem:[#allocation2 + $0x8] sm:$0xff] %vm327, %v320
      %330 = vst.msk [vmem:[#allocation2 + $0x10] sm:$0xff] %vm327, %v321
      %331 = vst.msk [vmem:[#allocation2 + $0x18] sm:$0xff] %vm327, %v322
      %332 = vst.msk [vmem:[#allocation2 + $0x20] sm:$0xff] %vm327, %v323
      %333 = vst.msk [vmem:[#allocation2 + $0x28] sm:$0xff] %vm327, %v324
      %334 = vst.msk [vmem:[#allocation2 + $0x30] sm:$0xff] %vm327, %v325
      %335 = vst.msk [vmem:[#allocation2 + $0x38] sm:$0xff] %vm327, %v326
      %v336 = vld [vmem:[%s1] sm:$0x1]
      %v337 = vld [vmem:[%s1 + $0x1] sm:$0x1]
      %v338 = vld [vmem:[%s1 + $0x2] sm:$0x1]
      %v339 = vld [vmem:[%s1 + $0x3] sm:$0x1]
      %v340 = vld [vmem:[#allocation2] sm:$0xff]
      %v341 = vld [vmem:[#allocation2 + $0x8] sm:$0xff]
      %v342 = vld [vmem:[#allocation2 + $0x10] sm:$0xff]
      %v343 = vld [vmem:[#allocation2 + $0x18] sm:$0xff]
      %v344 = vld [vmem:[#allocation2 + $0x20] sm:$0xff]
      %v345 = vld [vmem:[#allocation2 + $0x28] sm:$0xff]
      %v346 = vld [vmem:[#allocation2 + $0x30] sm:$0xff]
      %v347 = vld [vmem:[#allocation2 + $0x38] sm:$0xff]
      %v348 = vlaneseq
      %v349 = vshrl.u32 %v348, 7
      %v350 = vsub.s32 0, %v349
      %v351 = vrot.slane %v336, %v350
      %v352 = vsub.f32 %v340, %v351
      %v353 = vsub.f32 %v341, %v351
      %v354 = vsub.f32 %v342, %v351
      %v355 = vsub.f32 %v343, %v351
      %v356 = vsub.f32 %v344, %v351
      %v357 = vsub.f32 %v345, %v351
      %v358 = vsub.f32 %v346, %v351
      %v359 = vsub.f32 %v347, %v351
      %v360 = vlaneseq
      %v361 = vshrl.u32 %v360, 7
      %v362 = vsub.s32 0, %v361
      %v363 = vrot.slane %v337, %v362
      %v364 = vmul.f32 %v352, %v363
      %v365 = vmul.f32 %v353, %v363
      %v366 = vmul.f32 %v354, %v363
      %v367 = vmul.f32 %v355, %v363
      %v368 = vmul.f32 %v356, %v363
      %v369 = vmul.f32 %v357, %v363
      %v370 = vmul.f32 %v358, %v363
      %v371 = vmul.f32 %v359, %v363
      %v372 = vlaneseq
      %v373 = vshrl.u32 %v372, 7
      %v374 = vsub.s32 0, %v373
      %v375 = vrot.slane %v338, %v374
      %v376 = vmax.f32 %v375, %v364
      %v377 = vmax.f32 %v375, %v365
      %v378 = vmax.f32 %v375, %v366
      %v379 = vmax.f32 %v375, %v367
      %v380 = vmax.f32 %v375, %v368
      %v381 = vmax.f32 %v375, %v369
      %v382 = vmax.f32 %v375, %v370
      %v383 = vmax.f32 %v375, %v371
      %v384 = vlaneseq
      %v385 = vshrl.u32 %v384, 7
      %v386 = vsub.s32 0, %v385
      %v387 = vrot.slane %v339, %v386
      %v388 = vmin.f32 %v387, %v376
      %v389 = vmin.f32 %v387, %v377
      %v390 = vmin.f32 %v387, %v378
      %v391 = vmin.f32 %v387, %v379
      %v392 = vmin.f32 %v387, %v380
      %v393 = vmin.f32 %v387, %v381
      %v394 = vmin.f32 %v387, %v382
      %v395 = vmin.f32 %v387, %v383
      %v396 = vld [vmem:[%s2] sm:$0xff]
      %v397 = vld [vmem:[%s2 + $0x8] sm:$0xff]
      %v398 = vld [vmem:[%s2 + $0x10] sm:$0xff]
      %v399 = vld [vmem:[%s2 + $0x18] sm:$0xff]
      %v400 = vld [vmem:[%s2 + $0x20] sm:$0xff]
      %v401 = vld [vmem:[%s2 + $0x28] sm:$0xff]
      %v402 = vld [vmem:[%s2 + $0x30] sm:$0xff]
      %v403 = vld [vmem:[%s2 + $0x38] sm:$0xff]
      %v404 = vld [vmem:[%s2 + $0x40] sm:$0xff]
      %v405 = vld [vmem:[%s2 + $0x48] sm:$0xff]
      %v406 = vld [vmem:[%s2 + $0x50] sm:$0xff]
      %v407 = vld [vmem:[%s2 + $0x58] sm:$0xff]
      %v408 = vld [vmem:[%s2 + $0x60] sm:$0xff]
      %v409 = vld [vmem:[%s2 + $0x68] sm:$0xff]
      %v410 = vld [vmem:[%s2 + $0x70] sm:$0xff]
      %v411 = vld [vmem:[%s2 + $0x78] sm:$0xff]
      %v412 = vld [vmem:[%s3] sm:$0x1]
      %v414 = vlaneseq
      %v415 = vshrl.u32 %v414, 7
      %v416 = vsub.s32 0, %v415
      %v417 = vrot.slane %v412, %v416
      %419 = vmatprep.subr.mxu0 0.0
      %v420 = vand.u32 %v396, 4294901760
      %421 = vmatpush1.msra.mxu0 %v420
      %422 = vmatprep.subr.mxu0 0.0
      %v423 = vand.u32 %v397, 4294901760
      %424 = vmatpush1.msra.mxu0 %v423
      %425 = vmatprep.subr.mxu0 0.0
      %v426 = vand.u32 %v398, 4294901760
      %427 = vmatpush1.msra.mxu0 %v426
      %428 = vmatprep.subr.mxu0 0.0
      %v429 = vand.u32 %v399, 4294901760
      %430 = vmatpush1.msra.mxu0 %v429
      %431 = vmatprep.subr.mxu0 0.0
      %v432 = vand.u32 %v400, 4294901760
      %433 = vmatpush1.msra.mxu0 %v432
      %434 = vmatprep.subr.mxu0 0.0
      %v435 = vand.u32 %v401, 4294901760
      %436 = vmatpush1.msra.mxu0 %v435
      %437 = vmatprep.subr.mxu0 0.0
      %v438 = vand.u32 %v402, 4294901760
      %439 = vmatpush1.msra.mxu0 %v438
      %440 = vmatprep.subr.mxu0 0.0
      %v441 = vand.u32 %v403, 4294901760
      %442 = vmatpush1.msra.mxu0 %v441
      %443 = vmatprep.subr.mxu0 0.0
      %v444 = vand.u32 %v404, 4294901760
      %445 = vmatpush1.msra.mxu0 %v444
      %446 = vmatprep.subr.mxu0 0.0
      %v447 = vand.u32 %v405, 4294901760
      %448 = vmatpush1.msra.mxu0 %v447
      %449 = vmatprep.subr.mxu0 0.0
      %v450 = vand.u32 %v406, 4294901760
      %451 = vmatpush1.msra.mxu0 %v450
      %452 = vmatprep.subr.mxu0 0.0
      %v453 = vand.u32 %v407, 4294901760
      %454 = vmatpush1.msra.mxu0 %v453
      %455 = vmatprep.subr.mxu0 0.0
      %v456 = vand.u32 %v408, 4294901760
      %457 = vmatpush1.msra.mxu0 %v456
      %458 = vmatprep.subr.mxu0 0.0
      %v459 = vand.u32 %v409, 4294901760
      %460 = vmatpush1.msra.mxu0 %v459
      %461 = vmatprep.subr.mxu0 0.0
      %v462 = vand.u32 %v410, 4294901760
      %463 = vmatpush1.msra.mxu0 %v462
      %464 = vmatprep.subr.mxu0 0.0
      %v465 = vand.u32 %v411, 4294901760
      %466 = vmatpush1.msra.mxu0 %v465
      %467 = vmatprep.subr.mxu0 0.0
      %468 = vmatpush1.msra.mxu0 0.0
      %469 = vmatprep.subr.mxu0 0.0
      %470 = vmatpush1.msra.mxu0 0.0
      %471 = vmatprep.subr.mxu0 0.0
      %472 = vmatpush1.msra.mxu0 0.0
      %473 = vmatprep.subr.mxu0 0.0
      %474 = vmatpush1.msra.mxu0 0.0
      %475 = vmatprep.subr.mxu0 0.0
      %476 = vmatpush1.msra.mxu0 0.0
      %477 = vmatprep.subr.mxu0 0.0
      %478 = vmatpush1.msra.mxu0 0.0
      %479 = vmatprep.subr.mxu0 0.0
      %480 = vmatpush1.msra.mxu0 0.0
      %481 = vmatprep.subr.mxu0 0.0
      %482 = vmatpush1.msra.mxu0 0.0
      %483 = vmatprep.subr.mxu0 0.0
      %484 = vmatpush1.msra.mxu0 0.0
      %485 = vmatprep.subr.mxu0 0.0
      %486 = vmatpush1.msra.mxu0 0.0
      %487 = vmatprep.subr.mxu0 0.0
      %488 = vmatpush1.msra.mxu0 0.0
      %489 = vmatprep.subr.mxu0 0.0
      %490 = vmatpush1.msra.mxu0 0.0
      %491 = vmatprep.subr.mxu0 0.0
      %492 = vmatpush1.msra.mxu0 0.0
      %493 = vmatprep.subr.mxu0 0.0
      %494 = vmatpush1.msra.mxu0 0.0
      %495 = vmatprep.subr.mxu0 0.0
      %496 = vmatpush1.msra.mxu0 0.0
      %497 = vmatprep.subr.mxu0 0.0
      %498 = vmatpush1.msra.mxu0 0.0
      %499 = vmatprep.mubr.f32.mxu0 0.0
      %v500 = vand.u32 %v388, 4294901760
      %v501 = vsub.f32 %v388, %v500
      %v502 = vand.u32 %v501, 4294901760
      %v503 = vsub.f32 %v501, %v502
      %v504 = vand.u32 %v503, 4294901760
      %505 = vmatmul.mubr.f32.gmra.mrb[0].mxu0 %v504
      %v506 = vpop.f32.mrb[0].mxu0
      %v507 = vadd.f32 %v417, %v506
      %v508 = vpop.f32.mrb[0].mxu0
      %509 = vmatprep.mubr.f32.mxu0 0.0
      %v510 = vand.u32 %v389, 4294901760
      %v511 = vsub.f32 %v389, %v510
      %v512 = vand.u32 %v511, 4294901760
      %v513 = vsub.f32 %v511, %v512
      %v514 = vand.u32 %v513, 4294901760
      %515 = vmatmul.mubr.f32.gmra.mrb[0].mxu0 %v514
      %v516 = vpop.f32.mrb[0].mxu0
      %v517 = vadd.f32 %v417, %v516
      %v518 = vpop.f32.mrb[0].mxu0
      %519 = vmatprep.mubr.f32.mxu0 0.0
      %v520 = vand.u32 %v390, 4294901760
      %v521 = vsub.f32 %v390, %v520
      %v522 = vand.u32 %v521, 4294901760
      %v523 = vsub.f32 %v521, %v522
      %v524 = vand.u32 %v523, 4294901760
      %525 = vmatmul.mubr.f32.gmra.mrb[0].mxu0 %v524
      %v526 = vpop.f32.mrb[0].mxu0
      %v527 = vadd.f32 %v417, %v526
      %v528 = vpop.f32.mrb[0].mxu0
      %529 = vmatprep.mubr.f32.mxu0 0.0
      %v530 = vand.u32 %v391, 4294901760
      %v531 = vsub.f32 %v391, %v530
      %v532 = vand.u32 %v531, 4294901760
      %v533 = vsub.f32 %v531, %v532
      %v534 = vand.u32 %v533, 4294901760
      %535 = vmatmul.mubr.f32.gmra.mrb[0].mxu0 %v534
      %v536 = vpop.f32.mrb[0].mxu0
      %v537 = vadd.f32 %v417, %v536
      %v538 = vpop.f32.mrb[0].mxu0
      %539 = vmatprep.mubr.f32.mxu0 0.0
      %v540 = vand.u32 %v392, 4294901760
      %v541 = vsub.f32 %v392, %v540
      %v542 = vand.u32 %v541, 4294901760
      %v543 = vsub.f32 %v541, %v542
      %v544 = vand.u32 %v543, 4294901760
      %545 = vmatmul.mubr.f32.gmra.mrb[0].mxu0 %v544
      %v546 = vpop.f32.mrb[0].mxu0
      %v547 = vadd.f32 %v417, %v546
      %v548 = vpop.f32.mrb[0].mxu0
      %549 = vmatprep.mubr.f32.mxu0 0.0
      %v550 = vand.u32 %v393, 4294901760
      %v551 = vsub.f32 %v393, %v550
      %v552 = vand.u32 %v551, 4294901760
      %v553 = vsub.f32 %v551, %v552
      %v554 = vand.u32 %v553, 4294901760
      %555 = vmatmul.mubr.f32.gmra.mrb[0].mxu0 %v554
      %v556 = vpop.f32.mrb[0].mxu0
      %v557 = vadd.f32 %v417, %v556
      %v558 = vpop.f32.mrb[0].mxu0
      %559 = vmatprep.mubr.f32.mxu0 0.0
      %v560 = vand.u32 %v394, 4294901760
      %v561 = vsub.f32 %v394, %v560
      %v562 = vand.u32 %v561, 4294901760
      %v563 = vsub.f32 %v561, %v562
      %v564 = vand.u32 %v563, 4294901760
      %565 = vmatmul.mubr.f32.gmra.mrb[0].mxu0 %v564
      %v566 = vpop.f32.mrb[0].mxu0
      %v567 = vadd.f32 %v417, %v566
      %v568 = vpop.f32.mrb[0].mxu0
      %569 = vmatprep.mubr.f32.mxu0 0.0
      %v570 = vand.u32 %v395, 4294901760
      %v571 = vsub.f32 %v395, %v570
      %v572 = vand.u32 %v571, 4294901760
      %v573 = vsub.f32 %v571, %v572
      %v574 = vand.u32 %v573, 4294901760
      %575 = vmatmul.mubr.f32.gmra.mrb[0].mxu0 %v574
      %v576 = vpop.f32.mrb[0].mxu0
      %v577 = vadd.f32 %v417, %v576
      %v578 = vpop.f32.mrb[0].mxu0
      %579 = vdwg.mxu0
      %580 = vmatprep.subr.mxu0 0.0
      %v581 = vand.u32 %v396, 4294901760
      %v582 = vsub.f32 %v396, %v581
      %v583 = vand.u32 %v582, 4294901760
      %v584 = vsub.f32 %v582, %v583
      %v585 = vand.u32 %v584, 4294901760
      %586 = vmatpush1.msra.mxu0 %v585
      %587 = vmatprep.subr.mxu0 0.0
      %v588 = vand.u32 %v397, 4294901760
      %v589 = vsub.f32 %v397, %v588
      %v590 = vand.u32 %v589, 4294901760
      %v591 = vsub.f32 %v589, %v590
      %v592 = vand.u32 %v591, 4294901760
      %593 = vmatpush1.msra.mxu0 %v592
      %594 = vmatprep.subr.mxu0 0.0
      %v595 = vand.u32 %v398, 4294901760
      %v596 = vsub.f32 %v398, %v595
      %v597 = vand.u32 %v596, 4294901760
      %v598 = vsub.f32 %v596, %v597
      %v599 = vand.u32 %v598, 4294901760
      %600 = vmatpush1.msra.mxu0 %v599
      %601 = vmatprep.subr.mxu0 0.0
      %v602 = vand.u32 %v399, 4294901760
      %v603 = vsub.f32 %v399, %v602
      %v604 = vand.u32 %v603, 4294901760
      %v605 = vsub.f32 %v603, %v604
      %v606 = vand.u32 %v605, 4294901760
      %607 = vmatpush1.msra.mxu0 %v606
      %608 = vmatprep.subr.mxu0 0.0
      %v609 = vand.u32 %v400, 4294901760
      %v610 = vsub.f32 %v400, %v609
      %v611 = vand.u32 %v610, 4294901760
      %v612 = vsub.f32 %v610, %v611
      %v613 = vand.u32 %v612, 4294901760
      %614 = vmatpush1.msra.mxu0 %v613
      %615 = vmatprep.subr.mxu0 0.0
      %v616 = vand.u32 %v401, 4294901760
      %v617 = vsub.f32 %v401, %v616
      %v618 = vand.u32 %v617, 4294901760
      %v619 = vsub.f32 %v617, %v618
      %v620 = vand.u32 %v619, 4294901760
      %621 = vmatpush1.msra.mxu0 %v620
      %622 = vmatprep.subr.mxu0 0.0
      %v623 = vand.u32 %v402, 4294901760
      %v624 = vsub.f32 %v402, %v623
      %v625 = vand.u32 %v624, 4294901760
      %v626 = vsub.f32 %v624, %v625
      %v627 = vand.u32 %v626, 4294901760
      %628 = vmatpush1.msra.mxu0 %v627
      %629 = vmatprep.subr.mxu0 0.0
      %v630 = vand.u32 %v403, 4294901760
      %v631 = vsub.f32 %v403, %v630
      %v632 = vand.u32 %v631, 4294901760
      %v633 = vsub.f32 %v631, %v632
      %v634 = vand.u32 %v633, 4294901760
      %635 = vmatpush1.msra.mxu0 %v634
      %636 = vmatprep.subr.mxu0 0.0
      %v637 = vand.u32 %v404, 4294901760
      %v638 = vsub.f32 %v404, %v637
      %v639 = vand.u32 %v638, 4294901760
      %v640 = vsub.f32 %v638, %v639
      %v641 = vand.u32 %v640, 4294901760
      %642 = vmatpush1.msra.mxu0 %v641
      %643 = vmatprep.subr.mxu0 0.0
      %v644 = vand.u32 %v405, 4294901760
      %v645 = vsub.f32 %v405, %v644
      %v646 = vand.u32 %v645, 4294901760
      %v647 = vsub.f32 %v645, %v646
      %v648 = vand.u32 %v647, 4294901760
      %649 = vmatpush1.msra.mxu0 %v648
      %650 = vmatprep.subr.mxu0 0.0
      %v651 = vand.u32 %v406, 4294901760
      %v652 = vsub.f32 %v406, %v651
      %v653 = vand.u32 %v652, 4294901760
      %v654 = vsub.f32 %v652, %v653
      %v655 = vand.u32 %v654, 4294901760
      %656 = vmatpush1.msra.mxu0 %v655
      %657 = vmatprep.subr.mxu0 0.0
      %v658 = vand.u32 %v407, 4294901760
      %v659 = vsub.f32 %v407, %v658
      %v660 = vand.u32 %v659, 4294901760
      %v661 = vsub.f32 %v659, %v660
      %v662 = vand.u32 %v661, 4294901760
      %663 = vmatpush1.msra.mxu0 %v662
      %664 = vmatprep.subr.mxu0 0.0
      %v665 = vand.u32 %v408, 4294901760
      %v666 = vsub.f32 %v408, %v665
      %v667 = vand.u32 %v666, 4294901760
      %v668 = vsub.f32 %v666, %v667
      %v669 = vand.u32 %v668, 4294901760
      %670 = vmatpush1.msra.mxu0 %v669
      %671 = vmatprep.subr.mxu0 0.0
      %v672 = vand.u32 %v409, 4294901760
      %v673 = vsub.f32 %v409, %v672
      %v674 = vand.u32 %v673, 4294901760
      %v675 = vsub.f32 %v673, %v674
      %v676 = vand.u32 %v675, 4294901760
      %677 = vmatpush1.msra.mxu0 %v676
      %678 = vmatprep.subr.mxu0 0.0
      %v679 = vand.u32 %v410, 4294901760
      %v680 = vsub.f32 %v410, %v679
      %v681 = vand.u32 %v680, 4294901760
      %v682 = vsub.f32 %v680, %v681
      %v683 = vand.u32 %v682, 4294901760
      %684 = vmatpush1.msra.mxu0 %v683
      %685 = vmatprep.subr.mxu0 0.0
      %v686 = vand.u32 %v411, 4294901760
      %v687 = vsub.f32 %v411, %v686
      %v688 = vand.u32 %v687, 4294901760
      %v689 = vsub.f32 %v687, %v688
      %v690 = vand.u32 %v689, 4294901760
      %691 = vmatpush1.msra.mxu0 %v690
      %692 = vmatprep.subr.mxu0 0.0
      %693 = vmatpush1.msra.mxu0 0.0
      %694 = vmatprep.subr.mxu0 0.0
      %695 = vmatpush1.msra.mxu0 0.0
      %696 = vmatprep.subr.mxu0 0.0
      %697 = vmatpush1.msra.mxu0 0.0
      %698 = vmatprep.subr.mxu0 0.0
      %699 = vmatpush1.msra.mxu0 0.0
      %700 = vmatprep.subr.mxu0 0.0
      %701 = vmatpush1.msra.mxu0 0.0
      %702 = vmatprep.subr.mxu0 0.0
      %703 = vmatpush1.msra.mxu0 0.0
      %704 = vmatprep.subr.mxu0 0.0
      %705 = vmatpush1.msra.mxu0 0.0
      %706 = vmatprep.subr.mxu0 0.0
      %707 = vmatpush1.msra.mxu0 0.0
      %708 = vmatprep.subr.mxu0 0.0
      %709 = vmatpush1.msra.mxu0 0.0
      %710 = vmatprep.subr.mxu0 0.0
      %711 = vmatpush1.msra.mxu0 0.0
      %712 = vmatprep.subr.mxu0 0.0
      %713 = vmatpush1.msra.mxu0 0.0
      %714 = vmatprep.subr.mxu0 0.0
      %715 = vmatpush1.msra.mxu0 0.0
      %716 = vmatprep.subr.mxu0 0.0
      %717 = vmatpush1.msra.mxu0 0.0
      %718 = vmatprep.subr.mxu0 0.0
      %719 = vmatpush1.msra.mxu0 0.0
      %720 = vmatprep.subr.mxu0 0.0
      %721 = vmatpush1.msra.mxu0 0.0
      %722 = vmatprep.subr.mxu0 0.0
      %723 = vmatpush1.msra.mxu0 0.0
      %724 = vmatprep.mubr.f32.mxu0 0.0
      %v725 = vand.u32 %v388, 4294901760
      %726 = vmatmul.mubr.f32.gmra.mrb[0].mxu0 %v725
      %v727 = vpop.f32.mrb[0].mxu0
      %v728 = vadd.f32 %v507, %v727
      %v729 = vpop.f32.mrb[0].mxu0
      %730 = vmatprep.mubr.f32.mxu0 0.0
      %v731 = vand.u32 %v389, 4294901760
      %732 = vmatmul.mubr.f32.gmra.mrb[0].mxu0 %v731
      %v733 = vpop.f32.mrb[0].mxu0
      %v734 = vadd.f32 %v517, %v733
      %v735 = vpop.f32.mrb[0].mxu0
      %736 = vmatprep.mubr.f32.mxu0 0.0
      %v737 = vand.u32 %v390, 4294901760
      %738 = vmatmul.mubr.f32.gmra.mrb[0].mxu0 %v737
      %v739 = vpop.f32.mrb[0].mxu0
      %v740 = vadd.f32 %v527, %v739
      %v741 = vpop.f32.mrb[0].mxu0
      %742 = vmatprep.mubr.f32.mxu0 0.0
      %v743 = vand.u32 %v391, 4294901760
      %744 = vmatmul.mubr.f32.gmra.mrb[0].mxu0 %v743
      %v745 = vpop.f32.mrb[0].mxu0
      %v746 = vadd.f32 %v537, %v745
      %v747 = vpop.f32.mrb[0].mxu0
      %748 = vmatprep.mubr.f32.mxu0 0.0
      %v749 = vand.u32 %v392, 4294901760
      %750 = vmatmul.mubr.f32.gmra.mrb[0].mxu0 %v749
      %v751 = vpop.f32.mrb[0].mxu0
      %v752 = vadd.f32 %v547, %v751
      %v753 = vpop.f32.mrb[0].mxu0
      %754 = vmatprep.mubr.f32.mxu0 0.0
      %v755 = vand.u32 %v393, 4294901760
      %756 = vmatmul.mubr.f32.gmra.mrb[0].mxu0 %v755
      %v757 = vpop.f32.mrb[0].mxu0
      %v758 = vadd.f32 %v557, %v757
      %v759 = vpop.f32.mrb[0].mxu0
      %760 = vmatprep.mubr.f32.mxu0 0.0
      %v761 = vand.u32 %v394, 4294901760
      %762 = vmatmul.mubr.f32.gmra.mrb[0].mxu0 %v761
      %v763 = vpop.f32.mrb[0].mxu0
      %v764 = vadd.f32 %v567, %v763
      %v765 = vpop.f32.mrb[0].mxu0
      %766 = vmatprep.mubr.f32.mxu0 0.0
      %v767 = vand.u32 %v395, 4294901760
      %768 = vmatmul.mubr.f32.gmra.mrb[0].mxu0 %v767
      %v769 = vpop.f32.mrb[0].mxu0
      %v770 = vadd.f32 %v577, %v769
      %v771 = vpop.f32.mrb[0].mxu0
      %772 = vdwg.mxu0
      %773 = vmatprep.subr.mxu0 0.0
      %v774 = vand.u32 %v396, 4294901760
      %v775 = vsub.f32 %v396, %v774
      %776 = vmatpush1.msra.mxu0 %v775
      %777 = vmatprep.subr.mxu0 0.0
      %v778 = vand.u32 %v397, 4294901760
      %v779 = vsub.f32 %v397, %v778
      %780 = vmatpush1.msra.mxu0 %v779
      %781 = vmatprep.subr.mxu0 0.0
      %v782 = vand.u32 %v398, 4294901760
      %v783 = vsub.f32 %v398, %v782
      %784 = vmatpush1.msra.mxu0 %v783
      %785 = vmatprep.subr.mxu0 0.0
      %v786 = vand.u32 %v399, 4294901760
      %v787 = vsub.f32 %v399, %v786
      %788 = vmatpush1.msra.mxu0 %v787
      %789 = vmatprep.subr.mxu0 0.0
      %v790 = vand.u32 %v400, 4294901760
      %v791 = vsub.f32 %v400, %v790
      %792 = vmatpush1.msra.mxu0 %v791
      %793 = vmatprep.subr.mxu0 0.0
      %v794 = vand.u32 %v401, 4294901760
      %v795 = vsub.f32 %v401, %v794
      %796 = vmatpush1.msra.mxu0 %v795
      %797 = vmatprep.subr.mxu0 0.0
      %v798 = vand.u32 %v402, 4294901760
      %v799 = vsub.f32 %v402, %v798
      %800 = vmatpush1.msra.mxu0 %v799
      %801 = vmatprep.subr.mxu0 0.0
      %v802 = vand.u32 %v403, 4294901760
      %v803 = vsub.f32 %v403, %v802
      %804 = vmatpush1.msra.mxu0 %v803
      %805 = vmatprep.subr.mxu0 0.0
      %v806 = vand.u32 %v404, 4294901760
      %v807 = vsub.f32 %v404, %v806
      %808 = vmatpush1.msra.mxu0 %v807
      %809 = vmatprep.subr.mxu0 0.0
      %v810 = vand.u32 %v405, 4294901760
      %v811 = vsub.f32 %v405, %v810
      %812 = vmatpush1.msra.mxu0 %v811
      %813 = vmatprep.subr.mxu0 0.0
      %v814 = vand.u32 %v406, 4294901760
      %v815 = vsub.f32 %v406, %v814
      %816 = vmatpush1.msra.mxu0 %v815
      %817 = vmatprep.subr.mxu0 0.0
      %v818 = vand.u32 %v407, 4294901760
      %v819 = vsub.f32 %v407, %v818
      %820 = vmatpush1.msra.mxu0 %v819
      %821 = vmatprep.subr.mxu0 0.0
      %v822 = vand.u32 %v408, 4294901760
      %v823 = vsub.f32 %v408, %v822
      %824 = vmatpush1.msra.mxu0 %v823
      %825 = vmatprep.subr.mxu0 0.0
      %v826 = vand.u32 %v409, 4294901760
      %v827 = vsub.f32 %v409, %v826
      %828 = vmatpush1.msra.mxu0 %v827
      %829 = vmatprep.subr.mxu0 0.0
      %v830 = vand.u32 %v410, 4294901760
      %v831 = vsub.f32 %v410, %v830
      %832 = vmatpush1.msra.mxu0 %v831
      %833 = vmatprep.subr.mxu0 0.0
      %v834 = vand.u32 %v411, 4294901760
      %v835 = vsub.f32 %v411, %v834
      %836 = vmatpush1.msra.mxu0 %v835
      %837 = vmatprep.subr.mxu0 0.0
      %838 = vmatpush1.msra.mxu0 0.0
      %839 = vmatprep.subr.mxu0 0.0
      %840 = vmatpush1.msra.mxu0 0.0
      %841 = vmatprep.subr.mxu0 0.0
      %842 = vmatpush1.msra.mxu0 0.0
      %843 = vmatprep.subr.mxu0 0.0
      %844 = vmatpush1.msra.mxu0 0.0
      %845 = vmatprep.subr.mxu0 0.0
      %846 = vmatpush1.msra.mxu0 0.0
      %847 = vmatprep.subr.mxu0 0.0
      %848 = vmatpush1.msra.mxu0 0.0
      %849 = vmatprep.subr.mxu0 0.0
      %850 = vmatpush1.msra.mxu0 0.0
      %851 = vmatprep.subr.mxu0 0.0
      %852 = vmatpush1.msra.mxu0 0.0
      %853 = vmatprep.subr.mxu0 0.0
      %854 = vmatpush1.msra.mxu0 0.0
      %855 = vmatprep.subr.mxu0 0.0
      %856 = vmatpush1.msra.mxu0 0.0
      %857 = vmatprep.subr.mxu0 0.0
      %858 = vmatpush1.msra.mxu0 0.0
      %859 = vmatprep.subr.mxu0 0.0
      %860 = vmatpush1.msra.mxu0 0.0
      %861 = vmatprep.subr.mxu0 0.0
      %862 = vmatpush1.msra.mxu0 0.0
      %863 = vmatprep.subr.mxu0 0.0
      %864 = vmatpush1.msra.mxu0 0.0
      %865 = vmatprep.subr.mxu0 0.0
      %866 = vmatpush1.msra.mxu0 0.0
      %867 = vmatprep.subr.mxu0 0.0
      %868 = vmatpush1.msra.mxu0 0.0
      %869 = vmatprep.mubr.f32.mxu0 0.0
      %v870 = vand.u32 %v388, 4294901760
      %v871 = vsub.f32 %v388, %v870
      %872 = vmatmul.mubr.f32.gmra.mrb[0].mxu0 %v871
      %v873 = vpop.f32.mrb[0].mxu0
      %v874 = vadd.f32 %v728, %v873
      %v875 = vpop.f32.mrb[0].mxu0
      %876 = vmatprep.mubr.f32.mxu0 0.0
      %v877 = vand.u32 %v389, 4294901760
      %v878 = vsub.f32 %v389, %v877
      %879 = vmatmul.mubr.f32.gmra.mrb[0].mxu0 %v878
      %v880 = vpop.f32.mrb[0].mxu0
      %v881 = vadd.f32 %v734, %v880
      %v882 = vpop.f32.mrb[0].mxu0
      %883 = vmatprep.mubr.f32.mxu0 0.0
      %v884 = vand.u32 %v390, 4294901760
      %v885 = vsub.f32 %v390, %v884
      %886 = vmatmul.mubr.f32.gmra.mrb[0].mxu0 %v885
      %v887 = vpop.f32.mrb[0].mxu0
      %v888 = vadd.f32 %v740, %v887
      %v889 = vpop.f32.mrb[0].mxu0
      %890 = vmatprep.mubr.f32.mxu0 0.0
      %v891 = vand.u32 %v391, 4294901760
      %v892 = vsub.f32 %v391, %v891
      %893 = vmatmul.mubr.f32.gmra.mrb[0].mxu0 %v892
      %v894 = vpop.f32.mrb[0].mxu0
      %v895 = vadd.f32 %v746, %v894
      %v896 = vpop.f32.mrb[0].mxu0
      %897 = vmatprep.mubr.f32.mxu0 0.0
      %v898 = vand.u32 %v392, 4294901760
      %v899 = vsub.f32 %v392, %v898
      %900 = vmatmul.mubr.f32.gmra.mrb[0].mxu0 %v899
      %v901 = vpop.f32.mrb[0].mxu0
      %v902 = vadd.f32 %v752, %v901
      %v903 = vpop.f32.mrb[0].mxu0
      %904 = vmatprep.mubr.f32.mxu0 0.0
      %v905 = vand.u32 %v393, 4294901760
      %v906 = vsub.f32 %v393, %v905
      %907 = vmatmul.mubr.f32.gmra.mrb[0].mxu0 %v906
      %v908 = vpop.f32.mrb[0].mxu0
      %v909 = vadd.f32 %v758, %v908
      %v910 = vpop.f32.mrb[0].mxu0
      %911 = vmatprep.mubr.f32.mxu0 0.0
      %v912 = vand.u32 %v394, 4294901760
      %v913 = vsub.f32 %v394, %v912
      %914 = vmatmul.mubr.f32.gmra.mrb[0].mxu0 %v913
      %v915 = vpop.f32.mrb[0].mxu0
      %v916 = vadd.f32 %v764, %v915
      %v917 = vpop.f32.mrb[0].mxu0
      %918 = vmatprep.mubr.f32.mxu0 0.0
      %v919 = vand.u32 %v395, 4294901760
      %v920 = vsub.f32 %v395, %v919
      %921 = vmatmul.mubr.f32.gmra.mrb[0].mxu0 %v920
      %v922 = vpop.f32.mrb[0].mxu0
      %v923 = vadd.f32 %v770, %v922
      %v924 = vpop.f32.mrb[0].mxu0
      %925 = vdwg.mxu0
      %926 = vmatprep.subr.mxu0 0.0
      %v927 = vand.u32 %v396, 4294901760
      %928 = vmatpush1.msra.mxu0 %v927
      %929 = vmatprep.subr.mxu0 0.0
      %v930 = vand.u32 %v397, 4294901760
      %931 = vmatpush1.msra.mxu0 %v930
      %932 = vmatprep.subr.mxu0 0.0
      %v933 = vand.u32 %v398, 4294901760
      %934 = vmatpush1.msra.mxu0 %v933
      %935 = vmatprep.subr.mxu0 0.0
      %v936 = vand.u32 %v399, 4294901760
      %937 = vmatpush1.msra.mxu0 %v936
      %938 = vmatprep.subr.mxu0 0.0
      %v939 = vand.u32 %v400, 4294901760
      %940 = vmatpush1.msra.mxu0 %v939
      %941 = vmatprep.subr.mxu0 0.0
      %v942 = vand.u32 %v401, 4294901760
      %943 = vmatpush1.msra.mxu0 %v942
      %944 = vmatprep.subr.mxu0 0.0
      %v945 = vand.u32 %v402, 4294901760
      %946 = vmatpush1.msra.mxu0 %v945
      %947 = vmatprep.subr.mxu0 0.0
      %v948 = vand.u32 %v403, 4294901760
      %949 = vmatpush1.msra.mxu0 %v948
      %950 = vmatprep.subr.mxu0 0.0
      %v951 = vand.u32 %v404, 4294901760
      %952 = vmatpush1.msra.mxu0 %v951
      %953 = vmatprep.subr.mxu0 0.0
      %v954 = vand.u32 %v405, 4294901760
      %955 = vmatpush1.msra.mxu0 %v954
      %956 = vmatprep.subr.mxu0 0.0
      %v957 = vand.u32 %v406, 4294901760
      %958 = vmatpush1.msra.mxu0 %v957
      %959 = vmatprep.subr.mxu0 0.0
      %v960 = vand.u32 %v407, 4294901760
      %961 = vmatpush1.msra.mxu0 %v960
      %962 = vmatprep.subr.mxu0 0.0
      %v963 = vand.u32 %v408, 4294901760
      %964 = vmatpush1.msra.mxu0 %v963
      %965 = vmatprep.subr.mxu0 0.0
      %v966 = vand.u32 %v409, 4294901760
      %967 = vmatpush1.msra.mxu0 %v966
      %968 = vmatprep.subr.mxu0 0.0
      %v969 = vand.u32 %v410, 4294901760
      %970 = vmatpush1.msra.mxu0 %v969
      %971 = vmatprep.subr.mxu0 0.0
      %v972 = vand.u32 %v411, 4294901760
      %973 = vmatpush1.msra.mxu0 %v972
      %974 = vmatprep.subr.mxu0 0.0
      %975 = vmatpush1.msra.mxu0 0.0
      %976 = vmatprep.subr.mxu0 0.0
      %977 = vmatpush1.msra.mxu0 0.0
      %978 = vmatprep.subr.mxu0 0.0
      %979 = vmatpush1.msra.mxu0 0.0
      %980 = vmatprep.subr.mxu0 0.0
      %981 = vmatpush1.msra.mxu0 0.0
      %982 = vmatprep.subr.mxu0 0.0
      %983 = vmatpush1.msra.mxu0 0.0
      %984 = vmatprep.subr.mxu0 0.0
      %985 = vmatpush1.msra.mxu0 0.0
      %986 = vmatprep.subr.mxu0 0.0
      %987 = vmatpush1.msra.mxu0 0.0
      %988 = vmatprep.subr.mxu0 0.0
      %989 = vmatpush1.msra.mxu0 0.0
      %990 = vmatprep.subr.mxu0 0.0
      %991 = vmatpush1.msra.mxu0 0.0
      %992 = vmatprep.subr.mxu0 0.0
      %993 = vmatpush1.msra.mxu0 0.0
      %994 = vmatprep.subr.mxu0 0.0
      %995 = vmatpush1.msra.mxu0 0.0
      %996 = vmatprep.subr.mxu0 0.0
      %997 = vmatpush1.msra.mxu0 0.0
      %998 = vmatprep.subr.mxu0 0.0
      %999 = vmatpush1.msra.mxu0 0.0
      %1000 = vmatprep.subr.mxu0 0.0
      %1001 = vmatpush1.msra.mxu0 0.0
      %1002 = vmatprep.subr.mxu0 0.0
      %1003 = vmatpush1.msra.mxu0 0.0
      %1004 = vmatprep.subr.mxu0 0.0
      %1005 = vmatpush1.msra.mxu0 0.0
      %1006 = vmatprep.mubr.f32.mxu0 0.0
      %v1007 = vand.u32 %v388, 4294901760
      %v1008 = vsub.f32 %v388, %v1007
      %v1009 = vand.u32 %v1008, 4294901760
      %1010 = vmatmul.mubr.f32.gmra.mrb[0].mxu0 %v1009
      %v1011 = vpop.f32.mrb[0].mxu0
      %v1012 = vadd.f32 %v874, %v1011
      %v1013 = vpop.f32.mrb[0].mxu0
      %1014 = vmatprep.mubr.f32.mxu0 0.0
      %v1015 = vand.u32 %v389, 4294901760
      %v1016 = vsub.f32 %v389, %v1015
      %v1017 = vand.u32 %v1016, 4294901760
      %1018 = vmatmul.mubr.f32.gmra.mrb[0].mxu0 %v1017
      %v1019 = vpop.f32.mrb[0].mxu0
      %v1020 = vadd.f32 %v881, %v1019
      %v1021 = vpop.f32.mrb[0].mxu0
      %1022 = vmatprep.mubr.f32.mxu0 0.0
      %v1023 = vand.u32 %v390, 4294901760
      %v1024 = vsub.f32 %v390, %v1023
      %v1025 = vand.u32 %v1024, 4294901760
      %1026 = vmatmul.mubr.f32.gmra.mrb[0].mxu0 %v1025
      %v1027 = vpop.f32.mrb[0].mxu0
      %v1028 = vadd.f32 %v888, %v1027
      %v1029 = vpop.f32.mrb[0].mxu0
      %1030 = vmatprep.mubr.f32.mxu0 0.0
      %v1031 = vand.u32 %v391, 4294901760
      %v1032 = vsub.f32 %v391, %v1031
      %v1033 = vand.u32 %v1032, 4294901760
      %1034 = vmatmul.mubr.f32.gmra.mrb[0].mxu0 %v1033
      %v1035 = vpop.f32.mrb[0].mxu0
      %v1036 = vadd.f32 %v895, %v1035
      %v1037 = vpop.f32.mrb[0].mxu0
      %1038 = vmatprep.mubr.f32.mxu0 0.0
      %v1039 = vand.u32 %v392, 4294901760
      %v1040 = vsub.f32 %v392, %v1039
      %v1041 = vand.u32 %v1040, 4294901760
      %1042 = vmatmul.mubr.f32.gmra.mrb[0].mxu0 %v1041
      %v1043 = vpop.f32.mrb[0].mxu0
      %v1044 = vadd.f32 %v902, %v1043
      %v1045 = vpop.f32.mrb[0].mxu0
      %1046 = vmatprep.mubr.f32.mxu0 0.0
      %v1047 = vand.u32 %v393, 4294901760
      %v1048 = vsub.f32 %v393, %v1047
      %v1049 = vand.u32 %v1048, 4294901760
      %1050 = vmatmul.mubr.f32.gmra.mrb[0].mxu0 %v1049
      %v1051 = vpop.f32.mrb[0].mxu0
      %v1052 = vadd.f32 %v909, %v1051
      %v1053 = vpop.f32.mrb[0].mxu0
      %1054 = vmatprep.mubr.f32.mxu0 0.0
      %v1055 = vand.u32 %v394, 4294901760
      %v1056 = vsub.f32 %v394, %v1055
      %v1057 = vand.u32 %v1056, 4294901760
      %1058 = vmatmul.mubr.f32.gmra.mrb[0].mxu0 %v1057
      %v1059 = vpop.f32.mrb[0].mxu0
      %v1060 = vadd.f32 %v916, %v1059
      %v1061 = vpop.f32.mrb[0].mxu0
      %1062 = vmatprep.mubr.f32.mxu0 0.0
      %v1063 = vand.u32 %v395, 4294901760
      %v1064 = vsub.f32 %v395, %v1063
      %v1065 = vand.u32 %v1064, 4294901760
      %1066 = vmatmul.mubr.f32.gmra.mrb[0].mxu0 %v1065
      %v1067 = vpop.f32.mrb[0].mxu0
      %v1068 = vadd.f32 %v923, %v1067
      %v1069 = vpop.f32.mrb[0].mxu0
      %1070 = vdwg.mxu0
      %1071 = vmatprep.subr.mxu0 0.0
      %v1072 = vand.u32 %v396, 4294901760
      %v1073 = vsub.f32 %v396, %v1072
      %v1074 = vand.u32 %v1073, 4294901760
      %1075 = vmatpush1.msra.mxu0 %v1074
      %1076 = vmatprep.subr.mxu0 0.0
      %v1077 = vand.u32 %v397, 4294901760
      %v1078 = vsub.f32 %v397, %v1077
      %v1079 = vand.u32 %v1078, 4294901760
      %1080 = vmatpush1.msra.mxu0 %v1079
      %1081 = vmatprep.subr.mxu0 0.0
      %v1082 = vand.u32 %v398, 4294901760
      %v1083 = vsub.f32 %v398, %v1082
      %v1084 = vand.u32 %v1083, 4294901760
      %1085 = vmatpush1.msra.mxu0 %v1084
      %1086 = vmatprep.subr.mxu0 0.0
      %v1087 = vand.u32 %v399, 4294901760
      %v1088 = vsub.f32 %v399, %v1087
      %v1089 = vand.u32 %v1088, 4294901760
      %1090 = vmatpush1.msra.mxu0 %v1089
      %1091 = vmatprep.subr.mxu0 0.0
      %v1092 = vand.u32 %v400, 4294901760
      %v1093 = vsub.f32 %v400, %v1092
      %v1094 = vand.u32 %v1093, 4294901760
      %1095 = vmatpush1.msra.mxu0 %v1094
      %1096 = vmatprep.subr.mxu0 0.0
      %v1097 = vand.u32 %v401, 4294901760
      %v1098 = vsub.f32 %v401, %v1097
      %v1099 = vand.u32 %v1098, 4294901760
      %1100 = vmatpush1.msra.mxu0 %v1099
      %1101 = vmatprep.subr.mxu0 0.0
      %v1102 = vand.u32 %v402, 4294901760
      %v1103 = vsub.f32 %v402, %v1102
      %v1104 = vand.u32 %v1103, 4294901760
      %1105 = vmatpush1.msra.mxu0 %v1104
      %1106 = vmatprep.subr.mxu0 0.0
      %v1107 = vand.u32 %v403, 4294901760
      %v1108 = vsub.f32 %v403, %v1107
      %v1109 = vand.u32 %v1108, 4294901760
      %1110 = vmatpush1.msra.mxu0 %v1109
      %1111 = vmatprep.subr.mxu0 0.0
      %v1112 = vand.u32 %v404, 4294901760
      %v1113 = vsub.f32 %v404, %v1112
      %v1114 = vand.u32 %v1113, 4294901760
      %1115 = vmatpush1.msra.mxu0 %v1114
      %1116 = vmatprep.subr.mxu0 0.0
      %v1117 = vand.u32 %v405, 4294901760
      %v1118 = vsub.f32 %v405, %v1117
      %v1119 = vand.u32 %v1118, 4294901760
      %1120 = vmatpush1.msra.mxu0 %v1119
      %1121 = vmatprep.subr.mxu0 0.0
      %v1122 = vand.u32 %v406, 4294901760
      %v1123 = vsub.f32 %v406, %v1122
      %v1124 = vand.u32 %v1123, 4294901760
      %1125 = vmatpush1.msra.mxu0 %v1124
      %1126 = vmatprep.subr.mxu0 0.0
      %v1127 = vand.u32 %v407, 4294901760
      %v1128 = vsub.f32 %v407, %v1127
      %v1129 = vand.u32 %v1128, 4294901760
      %1130 = vmatpush1.msra.mxu0 %v1129
      %1131 = vmatprep.subr.mxu0 0.0
      %v1132 = vand.u32 %v408, 4294901760
      %v1133 = vsub.f32 %v408, %v1132
      %v1134 = vand.u32 %v1133, 4294901760
      %1135 = vmatpush1.msra.mxu0 %v1134
      %1136 = vmatprep.subr.mxu0 0.0
      %v1137 = vand.u32 %v409, 4294901760
      %v1138 = vsub.f32 %v409, %v1137
      %v1139 = vand.u32 %v1138, 4294901760
      %1140 = vmatpush1.msra.mxu0 %v1139
      %1141 = vmatprep.subr.mxu0 0.0
      %v1142 = vand.u32 %v410, 4294901760
      %v1143 = vsub.f32 %v410, %v1142
      %v1144 = vand.u32 %v1143, 4294901760
      %1145 = vmatpush1.msra.mxu0 %v1144
      %1146 = vmatprep.subr.mxu0 0.0
      %v1147 = vand.u32 %v411, 4294901760
      %v1148 = vsub.f32 %v411, %v1147
      %v1149 = vand.u32 %v1148, 4294901760
      %1150 = vmatpush1.msra.mxu0 %v1149
      %1151 = vmatprep.subr.mxu0 0.0
      %1152 = vmatpush1.msra.mxu0 0.0
      %1153 = vmatprep.subr.mxu0 0.0
      %1154 = vmatpush1.msra.mxu0 0.0
      %1155 = vmatprep.subr.mxu0 0.0
      %1156 = vmatpush1.msra.mxu0 0.0
      %1157 = vmatprep.subr.mxu0 0.0
      %1158 = vmatpush1.msra.mxu0 0.0
      %1159 = vmatprep.subr.mxu0 0.0
      %1160 = vmatpush1.msra.mxu0 0.0
      %1161 = vmatprep.subr.mxu0 0.0
      %1162 = vmatpush1.msra.mxu0 0.0
      %1163 = vmatprep.subr.mxu0 0.0
      %1164 = vmatpush1.msra.mxu0 0.0
      %1165 = vmatprep.subr.mxu0 0.0
      %1166 = vmatpush1.msra.mxu0 0.0
      %1167 = vmatprep.subr.mxu0 0.0
      %1168 = vmatpush1.msra.mxu0 0.0
      %1169 = vmatprep.subr.mxu0 0.0
      %1170 = vmatpush1.msra.mxu0 0.0
      %1171 = vmatprep.subr.mxu0 0.0
      %1172 = vmatpush1.msra.mxu0 0.0
      %1173 = vmatprep.subr.mxu0 0.0
      %1174 = vmatpush1.msra.mxu0 0.0
      %1175 = vmatprep.subr.mxu0 0.0
      %1176 = vmatpush1.msra.mxu0 0.0
      %1177 = vmatprep.subr.mxu0 0.0
      %1178 = vmatpush1.msra.mxu0 0.0
      %1179 = vmatprep.subr.mxu0 0.0
      %1180 = vmatpush1.msra.mxu0 0.0
      %1181 = vmatprep.subr.mxu0 0.0
      %1182 = vmatpush1.msra.mxu0 0.0
      %1183 = vmatprep.mubr.f32.mxu0 0.0
      %v1184 = vand.u32 %v388, 4294901760
      %1185 = vmatmul.mubr.f32.gmra.mrb[0].mxu0 %v1184
      %v1186 = vpop.f32.mrb[0].mxu0
      %v1187 = vadd.f32 %v1012, %v1186
      %v1188 = vpop.f32.mrb[0].mxu0
      %1189 = vmatprep.mubr.f32.mxu0 0.0
      %v1190 = vand.u32 %v389, 4294901760
      %1191 = vmatmul.mubr.f32.gmra.mrb[0].mxu0 %v1190
      %v1192 = vpop.f32.mrb[0].mxu0
      %v1193 = vadd.f32 %v1020, %v1192
      %v1194 = vpop.f32.mrb[0].mxu0
      %1195 = vmatprep.mubr.f32.mxu0 0.0
      %v1196 = vand.u32 %v390, 4294901760
      %1197 = vmatmul.mubr.f32.gmra.mrb[0].mxu0 %v1196
      %v1198 = vpop.f32.mrb[0].mxu0
      %v1199 = vadd.f32 %v1028, %v1198
      %v1200 = vpop.f32.mrb[0].mxu0
      %1201 = vmatprep.mubr.f32.mxu0 0.0
      %v1202 = vand.u32 %v391, 4294901760
      %1203 = vmatmul.mubr.f32.gmra.mrb[0].mxu0 %v1202
      %v1204 = vpop.f32.mrb[0].mxu0
      %v1205 = vadd.f32 %v1036, %v1204
      %v1206 = vpop.f32.mrb[0].mxu0
      %1207 = vmatprep.mubr.f32.mxu0 0.0
      %v1208 = vand.u32 %v392, 4294901760
      %1209 = vmatmul.mubr.f32.gmra.mrb[0].mxu0 %v1208
      %v1210 = vpop.f32.mrb[0].mxu0
      %v1211 = vadd.f32 %v1044, %v1210
      %v1212 = vpop.f32.mrb[0].mxu0
      %1213 = vmatprep.mubr.f32.mxu0 0.0
      %v1214 = vand.u32 %v393, 4294901760
      %1215 = vmatmul.mubr.f32.gmra.mrb[0].mxu0 %v1214
      %v1216 = vpop.f32.mrb[0].mxu0
      %v1217 = vadd.f32 %v1052, %v1216
      %v1218 = vpop.f32.mrb[0].mxu0
      %1219 = vmatprep.mubr.f32.mxu0 0.0
      %v1220 = vand.u32 %v394, 4294901760
      %1221 = vmatmul.mubr.f32.gmra.mrb[0].mxu0 %v1220
      %v1222 = vpop.f32.mrb[0].mxu0
      %v1223 = vadd.f32 %v1060, %v1222
      %v1224 = vpop.f32.mrb[0].mxu0
      %1225 = vmatprep.mubr.f32.mxu0 0.0
      %v1226 = vand.u32 %v395, 4294901760
      %1227 = vmatmul.mubr.f32.gmra.mrb[0].mxu0 %v1226
      %v1228 = vpop.f32.mrb[0].mxu0
      %v1229 = vadd.f32 %v1068, %v1228
      %v1230 = vpop.f32.mrb[0].mxu0
      %1231 = vdwg.mxu0
      %1232 = vmatprep.subr.mxu0 0.0
      %v1233 = vand.u32 %v396, 4294901760
      %1234 = vmatpush1.msra.mxu0 %v1233
      %1235 = vmatprep.subr.mxu0 0.0
      %v1236 = vand.u32 %v397, 4294901760
      %1237 = vmatpush1.msra.mxu0 %v1236
      %1238 = vmatprep.subr.mxu0 0.0
      %v1239 = vand.u32 %v398, 4294901760
      %1240 = vmatpush1.msra.mxu0 %v1239
      %1241 = vmatprep.subr.mxu0 0.0
      %v1242 = vand.u32 %v399, 4294901760
      %1243 = vmatpush1.msra.mxu0 %v1242
      %1244 = vmatprep.subr.mxu0 0.0
      %v1245 = vand.u32 %v400, 4294901760
      %1246 = vmatpush1.msra.mxu0 %v1245
      %1247 = vmatprep.subr.mxu0 0.0
      %v1248 = vand.u32 %v401, 4294901760
      %1249 = vmatpush1.msra.mxu0 %v1248
      %1250 = vmatprep.subr.mxu0 0.0
      %v1251 = vand.u32 %v402, 4294901760
      %1252 = vmatpush1.msra.mxu0 %v1251
      %1253 = vmatprep.subr.mxu0 0.0
      %v1254 = vand.u32 %v403, 4294901760
      %1255 = vmatpush1.msra.mxu0 %v1254
      %1256 = vmatprep.subr.mxu0 0.0
      %v1257 = vand.u32 %v404, 4294901760
      %1258 = vmatpush1.msra.mxu0 %v1257
      %1259 = vmatprep.subr.mxu0 0.0
      %v1260 = vand.u32 %v405, 4294901760
      %1261 = vmatpush1.msra.mxu0 %v1260
      %1262 = vmatprep.subr.mxu0 0.0
      %v1263 = vand.u32 %v406, 4294901760
      %1264 = vmatpush1.msra.mxu0 %v1263
      %1265 = vmatprep.subr.mxu0 0.0
      %v1266 = vand.u32 %v407, 4294901760
      %1267 = vmatpush1.msra.mxu0 %v1266
      %1268 = vmatprep.subr.mxu0 0.0
      %v1269 = vand.u32 %v408, 4294901760
      %1270 = vmatpush1.msra.mxu0 %v1269
      %1271 = vmatprep.subr.mxu0 0.0
      %v1272 = vand.u32 %v409, 4294901760
      %1273 = vmatpush1.msra.mxu0 %v1272
      %1274 = vmatprep.subr.mxu0 0.0
      %v1275 = vand.u32 %v410, 4294901760
      %1276 = vmatpush1.msra.mxu0 %v1275
      %1277 = vmatprep.subr.mxu0 0.0
      %v1278 = vand.u32 %v411, 4294901760
      %1279 = vmatpush1.msra.mxu0 %v1278
      %1280 = vmatprep.subr.mxu0 0.0
      %1281 = vmatpush1.msra.mxu0 0.0
      %1282 = vmatprep.subr.mxu0 0.0
      %1283 = vmatpush1.msra.mxu0 0.0
      %1284 = vmatprep.subr.mxu0 0.0
      %1285 = vmatpush1.msra.mxu0 0.0
      %1286 = vmatprep.subr.mxu0 0.0
      %1287 = vmatpush1.msra.mxu0 0.0
      %1288 = vmatprep.subr.mxu0 0.0
      %1289 = vmatpush1.msra.mxu0 0.0
      %1290 = vmatprep.subr.mxu0 0.0
      %1291 = vmatpush1.msra.mxu0 0.0
      %1292 = vmatprep.subr.mxu0 0.0
      %1293 = vmatpush1.msra.mxu0 0.0
      %1294 = vmatprep.subr.mxu0 0.0
      %1295 = vmatpush1.msra.mxu0 0.0
      %1296 = vmatprep.subr.mxu0 0.0
      %1297 = vmatpush1.msra.mxu0 0.0
      %1298 = vmatprep.subr.mxu0 0.0
      %1299 = vmatpush1.msra.mxu0 0.0
      %1300 = vmatprep.subr.mxu0 0.0
      %1301 = vmatpush1.msra.mxu0 0.0
      %1302 = vmatprep.subr.mxu0 0.0
      %1303 = vmatpush1.msra.mxu0 0.0
      %1304 = vmatprep.subr.mxu0 0.0
      %1305 = vmatpush1.msra.mxu0 0.0
      %1306 = vmatprep.subr.mxu0 0.0
      %1307 = vmatpush1.msra.mxu0 0.0
      %1308 = vmatprep.subr.mxu0 0.0
      %1309 = vmatpush1.msra.mxu0 0.0
      %1310 = vmatprep.subr.mxu0 0.0
      %1311 = vmatpush1.msra.mxu0 0.0
      %1312 = vmatprep.mubr.f32.mxu0 0.0
      %v1313 = vand.u32 %v388, 4294901760
      %1314 = vmatmul.mubr.f32.gmra.mrb[0].mxu0 %v1313
      %v1315 = vpop.f32.mrb[0].mxu0
      %v1316 = vadd.f32 %v1187, %v1315
      %v1317 = vpop.f32.mrb[0].mxu0
      %1318 = vmatprep.mubr.f32.mxu0 0.0
      %v1319 = vand.u32 %v389, 4294901760
      %1320 = vmatmul.mubr.f32.gmra.mrb[0].mxu0 %v1319
      %v1321 = vpop.f32.mrb[0].mxu0
      %v1322 = vadd.f32 %v1193, %v1321
      %v1323 = vpop.f32.mrb[0].mxu0
      %1324 = vmatprep.mubr.f32.mxu0 0.0
      %v1325 = vand.u32 %v390, 4294901760
      %1326 = vmatmul.mubr.f32.gmra.mrb[0].mxu0 %v1325
      %v1327 = vpop.f32.mrb[0].mxu0
      %v1328 = vadd.f32 %v1199, %v1327
      %v1329 = vpop.f32.mrb[0].mxu0
      %1330 = vmatprep.mubr.f32.mxu0 0.0
      %v1331 = vand.u32 %v391, 4294901760
      %1332 = vmatmul.mubr.f32.gmra.mrb[0].mxu0 %v1331
      %v1333 = vpop.f32.mrb[0].mxu0
      %v1334 = vadd.f32 %v1205, %v1333
      %v1335 = vpop.f32.mrb[0].mxu0
      %1336 = vmatprep.mubr.f32.mxu0 0.0
      %v1337 = vand.u32 %v392, 4294901760
      %1338 = vmatmul.mubr.f32.gmra.mrb[0].mxu0 %v1337
      %v1339 = vpop.f32.mrb[0].mxu0
      %v1340 = vadd.f32 %v1211, %v1339
      %v1341 = vpop.f32.mrb[0].mxu0
      %1342 = vmatprep.mubr.f32.mxu0 0.0
      %v1343 = vand.u32 %v393, 4294901760
      %1344 = vmatmul.mubr.f32.gmra.mrb[0].mxu0 %v1343
      %v1345 = vpop.f32.mrb[0].mxu0
      %v1346 = vadd.f32 %v1217, %v1345
      %v1347 = vpop.f32.mrb[0].mxu0
      %1348 = vmatprep.mubr.f32.mxu0 0.0
      %v1349 = vand.u32 %v394, 4294901760
      %1350 = vmatmul.mubr.f32.gmra.mrb[0].mxu0 %v1349
      %v1351 = vpop.f32.mrb[0].mxu0
      %v1352 = vadd.f32 %v1223, %v1351
      %v1353 = vpop.f32.mrb[0].mxu0
      %1354 = vmatprep.mubr.f32.mxu0 0.0
      %v1355 = vand.u32 %v395, 4294901760
      %1356 = vmatmul.mubr.f32.gmra.mrb[0].mxu0 %v1355
      %v1357 = vpop.f32.mrb[0].mxu0
      %v1358 = vadd.f32 %v1229, %v1357
      %v1359 = vpop.f32.mrb[0].mxu0
      %1360 = vdwg.mxu0
      %vm1361 = vcmp.ge.f32.partialorder %v1316, 0.0
      %vm1362 = vcmp.ge.f32.partialorder %v1322, 0.0
      %vm1363 = vcmp.ge.f32.partialorder %v1328, 0.0
      %vm1364 = vcmp.ge.f32.partialorder %v1334, 0.0
      %vm1365 = vcmp.ge.f32.partialorder %v1340, 0.0
      %vm1366 = vcmp.ge.f32.partialorder %v1346, 0.0
      %vm1367 = vcmp.ge.f32.partialorder %v1352, 0.0
      %vm1368 = vcmp.ge.f32.partialorder %v1358, 0.0
      %v1369 = vmul.f32 %v1316, 0.1
      %v1370 = vmul.f32 %v1322, 0.1
      %v1371 = vmul.f32 %v1328, 0.1
      %v1372 = vmul.f32 %v1334, 0.1
      %v1373 = vmul.f32 %v1340, 0.1
      %v1374 = vmul.f32 %v1346, 0.1
      %v1375 = vmul.f32 %v1352, 0.1
      %v1376 = vmul.f32 %v1358, 0.1
      %v1377 = vsel %vm1361, %v1316, %v1369
      %v1378 = vsel %vm1362, %v1322, %v1370
      %v1379 = vsel %vm1363, %v1328, %v1371
      %v1380 = vsel %vm1364, %v1334, %v1372
      %v1381 = vsel %vm1365, %v1340, %v1373
      %v1382 = vsel %vm1366, %v1346, %v1374
      %v1383 = vsel %vm1367, %v1352, %v1375
      %v1384 = vsel %vm1368, %v1358, %v1376
      %v1385 = vld [vmem:[%s4] sm:$0xff]
      %v1386 = vld [vmem:[%s4 + $0x8] sm:$0xff]
      %v1387 = vld [vmem:[%s4 + $0x10] sm:$0xff]
      %v1388 = vld [vmem:[%s4 + $0x18] sm:$0xff]
      %v1389 = vld [vmem:[%s4 + $0x20] sm:$0xff]
      %v1390 = vld [vmem:[%s4 + $0x28] sm:$0xff]
      %v1391 = vld [vmem:[%s4 + $0x30] sm:$0xff]
      %v1392 = vld [vmem:[%s4 + $0x38] sm:$0xff]
      %v1393 = vld [vmem:[%s4 + $0x40] sm:$0xff]
      %v1394 = vld [vmem:[%s4 + $0x48] sm:$0xff]
      %v1395 = vld [vmem:[%s4 + $0x50] sm:$0xff]
      %v1396 = vld [vmem:[%s4 + $0x58] sm:$0xff]
      %v1397 = vld [vmem:[%s4 + $0x60] sm:$0xff]
      %v1398 = vld [vmem:[%s4 + $0x68] sm:$0xff]
      %v1399 = vld [vmem:[%s4 + $0x70] sm:$0xff]
      %v1400 = vld [vmem:[%s4 + $0x78] sm:$0xff]
      %v1401 = vld [vmem:[%s5] sm:$0x1]
      %v1403 = vlaneseq
      %v1404 = vshrl.u32 %v1403, 7
      %v1405 = vsub.s32 0, %v1404
      %v1406 = vrot.slane %v1401, %v1405
      %1408 = vmatprep.subr.mxu0 0.0
      %v1409 = vand.u32 %v1385, 4294901760
      %1410 = vmatpush1.msra.mxu0 %v1409
      %1411 = vmatprep.subr.mxu0 0.0
      %v1412 = vand.u32 %v1386, 4294901760
      %1413 = vmatpush1.msra.mxu0 %v1412
      %1414 = vmatprep.subr.mxu0 0.0
      %v1415 = vand.u32 %v1387, 4294901760
      %1416 = vmatpush1.msra.mxu0 %v1415
      %1417 = vmatprep.subr.mxu0 0.0
      %v1418 = vand.u32 %v1388, 4294901760
      %1419 = vmatpush1.msra.mxu0 %v1418
      %1420 = vmatprep.subr.mxu0 0.0
      %v1421 = vand.u32 %v1389, 4294901760
      %1422 = vmatpush1.msra.mxu0 %v1421
      %1423 = vmatprep.subr.mxu0 0.0
      %v1424 = vand.u32 %v1390, 4294901760
      %1425 = vmatpush1.msra.mxu0 %v1424
      %1426 = vmatprep.subr.mxu0 0.0
      %v1427 = vand.u32 %v1391, 4294901760
      %1428 = vmatpush1.msra.mxu0 %v1427
      %1429 = vmatprep.subr.mxu0 0.0
      %v1430 = vand.u32 %v1392, 4294901760
      %1431 = vmatpush1.msra.mxu0 %v1430
      %1432 = vmatprep.subr.mxu0 0.0
      %v1433 = vand.u32 %v1393, 4294901760
      %1434 = vmatpush1.msra.mxu0 %v1433
      %1435 = vmatprep.subr.mxu0 0.0
      %v1436 = vand.u32 %v1394, 4294901760
      %1437 = vmatpush1.msra.mxu0 %v1436
      %1438 = vmatprep.subr.mxu0 0.0
      %v1439 = vand.u32 %v1395, 4294901760
      %1440 = vmatpush1.msra.mxu0 %v1439
      %1441 = vmatprep.subr.mxu0 0.0
      %v1442 = vand.u32 %v1396, 4294901760
      %1443 = vmatpush1.msra.mxu0 %v1442
      %1444 = vmatprep.subr.mxu0 0.0
      %v1445 = vand.u32 %v1397, 4294901760
      %1446 = vmatpush1.msra.mxu0 %v1445
      %1447 = vmatprep.subr.mxu0 0.0
      %v1448 = vand.u32 %v1398, 4294901760
      %1449 = vmatpush1.msra.mxu0 %v1448
      %1450 = vmatprep.subr.mxu0 0.0
      %v1451 = vand.u32 %v1399, 4294901760
      %1452 = vmatpush1.msra.mxu0 %v1451
      %1453 = vmatprep.subr.mxu0 0.0
      %v1454 = vand.u32 %v1400, 4294901760
      %1455 = vmatpush1.msra.mxu0 %v1454
      %1456 = vmatprep.subr.mxu0 0.0
      %1457 = vmatpush1.msra.mxu0 0.0
      %1458 = vmatprep.subr.mxu0 0.0
      %1459 = vmatpush1.msra.mxu0 0.0
      %1460 = vmatprep.subr.mxu0 0.0
      %1461 = vmatpush1.msra.mxu0 0.0
      %1462 = vmatprep.subr.mxu0 0.0
      %1463 = vmatpush1.msra.mxu0 0.0
      %1464 = vmatprep.subr.mxu0 0.0
      %1465 = vmatpush1.msra.mxu0 0.0
      %1466 = vmatprep.subr.mxu0 0.0
      %1467 = vmatpush1.msra.mxu0 0.0
      %1468 = vmatprep.subr.mxu0 0.0
      %1469 = vmatpush1.msra.mxu0 0.0
      %1470 = vmatprep.subr.mxu0 0.0
      %1471 = vmatpush1.msra.mxu0 0.0
      %1472 = vmatprep.subr.mxu0 0.0
      %1473 = vmatpush1.msra.mxu0 0.0
      %1474 = vmatprep.subr.mxu0 0.0
      %1475 = vmatpush1.msra.mxu0 0.0
      %1476 = vmatprep.subr.mxu0 0.0
      %1477 = vmatpush1.msra.mxu0 0.0
      %1478 = vmatprep.subr.mxu0 0.0
      %1479 = vmatpush1.msra.mxu0 0.0
      %1480 = vmatprep.subr.mxu0 0.0
      %1481 = vmatpush1.msra.mxu0 0.0
      %1482 = vmatprep.subr.mxu0 0.0
      %1483 = vmatpush1.msra.mxu0 0.0
      %1484 = vmatprep.subr.mxu0 0.0
      %1485 = vmatpush1.msra.mxu0 0.0
      %1486 = vmatprep.subr.mxu0 0.0
      %1487 = vmatpush1.msra.mxu0 0.0
      %1488 = vmatprep.mubr.f32.mxu0 0.0
      %v1489 = vand.u32 %v1377, 4294901760
      %v1490 = vsub.f32 %v1377, %v1489
      %v1491 = vand.u32 %v1490, 4294901760
      %v1492 = vsub.f32 %v1490, %v1491
      %v1493 = vand.u32 %v1492, 4294901760
      %1494 = vmatmul.mubr.f32.gmra.mrb[0].mxu0 %v1493
      %v1495 = vpop.f32.mrb[0].mxu0
      %v1496 = vadd.f32 %v1406, %v1495
      %v1497 = vpop.f32.mrb[0].mxu0
      %1498 = vmatprep.mubr.f32.mxu0 0.0
      %v1499 = vand.u32 %v1378, 4294901760
      %v1500 = vsub.f32 %v1378, %v1499
      %v1501 = vand.u32 %v1500, 4294901760
      %v1502 = vsub.f32 %v1500, %v1501
      %v1503 = vand.u32 %v1502, 4294901760
      %1504 = vmatmul.mubr.f32.gmra.mrb[0].mxu0 %v1503
      %v1505 = vpop.f32.mrb[0].mxu0
      %v1506 = vadd.f32 %v1406, %v1505
      %v1507 = vpop.f32.mrb[0].mxu0
      %1508 = vmatprep.mubr.f32.mxu0 0.0
      %v1509 = vand.u32 %v1379, 4294901760
      %v1510 = vsub.f32 %v1379, %v1509
      %v1511 = vand.u32 %v1510, 4294901760
      %v1512 = vsub.f32 %v1510, %v1511
      %v1513 = vand.u32 %v1512, 4294901760
      %1514 = vmatmul.mubr.f32.gmra.mrb[0].mxu0 %v1513
      %v1515 = vpop.f32.mrb[0].mxu0
      %v1516 = vadd.f32 %v1406, %v1515
      %v1517 = vpop.f32.mrb[0].mxu0
      %1518 = vmatprep.mubr.f32.mxu0 0.0
      %v1519 = vand.u32 %v1380, 4294901760
      %v1520 = vsub.f32 %v1380, %v1519
      %v1521 = vand.u32 %v1520, 4294901760
      %v1522 = vsub.f32 %v1520, %v1521
      %v1523 = vand.u32 %v1522, 4294901760
      %1524 = vmatmul.mubr.f32.gmra.mrb[0].mxu0 %v1523
      %v1525 = vpop.f32.mrb[0].mxu0
      %v1526 = vadd.f32 %v1406, %v1525
      %v1527 = vpop.f32.mrb[0].mxu0
      %1528 = vmatprep.mubr.f32.mxu0 0.0
      %v1529 = vand.u32 %v1381, 4294901760
      %v1530 = vsub.f32 %v1381, %v1529
      %v1531 = vand.u32 %v1530, 4294901760
      %v1532 = vsub.f32 %v1530, %v1531
      %v1533 = vand.u32 %v1532, 4294901760
      %1534 = vmatmul.mubr.f32.gmra.mrb[0].mxu0 %v1533
      %v1535 = vpop.f32.mrb[0].mxu0
      %v1536 = vadd.f32 %v1406, %v1535
      %v1537 = vpop.f32.mrb[0].mxu0
      %1538 = vmatprep.mubr.f32.mxu0 0.0
      %v1539 = vand.u32 %v1382, 4294901760
      %v1540 = vsub.f32 %v1382, %v1539
      %v1541 = vand.u32 %v1540, 4294901760
      %v1542 = vsub.f32 %v1540, %v1541
      %v1543 = vand.u32 %v1542, 4294901760
      %1544 = vmatmul.mubr.f32.gmra.mrb[0].mxu0 %v1543
      %v1545 = vpop.f32.mrb[0].mxu0
      %v1546 = vadd.f32 %v1406, %v1545
      %v1547 = vpop.f32.mrb[0].mxu0
      %1548 = vmatprep.mubr.f32.mxu0 0.0
      %v1549 = vand.u32 %v1383, 4294901760
      %v1550 = vsub.f32 %v1383, %v1549
      %v1551 = vand.u32 %v1550, 4294901760
      %v1552 = vsub.f32 %v1550, %v1551
      %v1553 = vand.u32 %v1552, 4294901760
      %1554 = vmatmul.mubr.f32.gmra.mrb[0].mxu0 %v1553
      %v1555 = vpop.f32.mrb[0].mxu0
      %v1556 = vadd.f32 %v1406, %v1555
      %v1557 = vpop.f32.mrb[0].mxu0
      %1558 = vmatprep.mubr.f32.mxu0 0.0
      %v1559 = vand.u32 %v1384, 4294901760
      %v1560 = vsub.f32 %v1384, %v1559
      %v1561 = vand.u32 %v1560, 4294901760
      %v1562 = vsub.f32 %v1560, %v1561
      %v1563 = vand.u32 %v1562, 4294901760
      %1564 = vmatmul.mubr.f32.gmra.mrb[0].mxu0 %v1563
      %v1565 = vpop.f32.mrb[0].mxu0
      %v1566 = vadd.f32 %v1406, %v1565
      %v1567 = vpop.f32.mrb[0].mxu0
      %1568 = vdwg.mxu0
      %1569 = vmatprep.subr.mxu0 0.0
      %v1570 = vand.u32 %v1385, 4294901760
      %v1571 = vsub.f32 %v1385, %v1570
      %v1572 = vand.u32 %v1571, 4294901760
      %v1573 = vsub.f32 %v1571, %v1572
      %v1574 = vand.u32 %v1573, 4294901760
      %1575 = vmatpush1.msra.mxu0 %v1574
      %1576 = vmatprep.subr.mxu0 0.0
      %v1577 = vand.u32 %v1386, 4294901760
      %v1578 = vsub.f32 %v1386, %v1577
      %v1579 = vand.u32 %v1578, 4294901760
      %v1580 = vsub.f32 %v1578, %v1579
      %v1581 = vand.u32 %v1580, 4294901760
      %1582 = vmatpush1.msra.mxu0 %v1581
      %1583 = vmatprep.subr.mxu0 0.0
      %v1584 = vand.u32 %v1387, 4294901760
      %v1585 = vsub.f32 %v1387, %v1584
      %v1586 = vand.u32 %v1585, 4294901760
      %v1587 = vsub.f32 %v1585, %v1586
      %v1588 = vand.u32 %v1587, 4294901760
      %1589 = vmatpush1.msra.mxu0 %v1588
      %1590 = vmatprep.subr.mxu0 0.0
      %v1591 = vand.u32 %v1388, 4294901760
      %v1592 = vsub.f32 %v1388, %v1591
      %v1593 = vand.u32 %v1592, 4294901760
      %v1594 = vsub.f32 %v1592, %v1593
      %v1595 = vand.u32 %v1594, 4294901760
      %1596 = vmatpush1.msra.mxu0 %v1595
      %1597 = vmatprep.subr.mxu0 0.0
      %v1598 = vand.u32 %v1389, 4294901760
      %v1599 = vsub.f32 %v1389, %v1598
      %v1600 = vand.u32 %v1599, 4294901760
      %v1601 = vsub.f32 %v1599, %v1600
      %v1602 = vand.u32 %v1601, 4294901760
      %1603 = vmatpush1.msra.mxu0 %v1602
      %1604 = vmatprep.subr.mxu0 0.0
      %v1605 = vand.u32 %v1390, 4294901760
      %v1606 = vsub.f32 %v1390, %v1605
      %v1607 = vand.u32 %v1606, 4294901760
      %v1608 = vsub.f32 %v1606, %v1607
      %v1609 = vand.u32 %v1608, 4294901760
      %1610 = vmatpush1.msra.mxu0 %v1609
      %1611 = vmatprep.subr.mxu0 0.0
      %v1612 = vand.u32 %v1391, 4294901760
      %v1613 = vsub.f32 %v1391, %v1612
      %v1614 = vand.u32 %v1613, 4294901760
      %v1615 = vsub.f32 %v1613, %v1614
      %v1616 = vand.u32 %v1615, 4294901760
      %1617 = vmatpush1.msra.mxu0 %v1616
      %1618 = vmatprep.subr.mxu0 0.0
      %v1619 = vand.u32 %v1392, 4294901760
      %v1620 = vsub.f32 %v1392, %v1619
      %v1621 = vand.u32 %v1620, 4294901760
      %v1622 = vsub.f32 %v1620, %v1621
      %v1623 = vand.u32 %v1622, 4294901760
      %1624 = vmatpush1.msra.mxu0 %v1623
      %1625 = vmatprep.subr.mxu0 0.0
      %v1626 = vand.u32 %v1393, 4294901760
      %v1627 = vsub.f32 %v1393, %v1626
      %v1628 = vand.u32 %v1627, 4294901760
      %v1629 = vsub.f32 %v1627, %v1628
      %v1630 = vand.u32 %v1629, 4294901760
      %1631 = vmatpush1.msra.mxu0 %v1630
      %1632 = vmatprep.subr.mxu0 0.0
      %v1633 = vand.u32 %v1394, 4294901760
      %v1634 = vsub.f32 %v1394, %v1633
      %v1635 = vand.u32 %v1634, 4294901760
      %v1636 = vsub.f32 %v1634, %v1635
      %v1637 = vand.u32 %v1636, 4294901760
      %1638 = vmatpush1.msra.mxu0 %v1637
      %1639 = vmatprep.subr.mxu0 0.0
      %v1640 = vand.u32 %v1395, 4294901760
      %v1641 = vsub.f32 %v1395, %v1640
      %v1642 = vand.u32 %v1641, 4294901760
      %v1643 = vsub.f32 %v1641, %v1642
      %v1644 = vand.u32 %v1643, 4294901760
      %1645 = vmatpush1.msra.mxu0 %v1644
      %1646 = vmatprep.subr.mxu0 0.0
      %v1647 = vand.u32 %v1396, 4294901760
      %v1648 = vsub.f32 %v1396, %v1647
      %v1649 = vand.u32 %v1648, 4294901760
      %v1650 = vsub.f32 %v1648, %v1649
      %v1651 = vand.u32 %v1650, 4294901760
      %1652 = vmatpush1.msra.mxu0 %v1651
      %1653 = vmatprep.subr.mxu0 0.0
      %v1654 = vand.u32 %v1397, 4294901760
      %v1655 = vsub.f32 %v1397, %v1654
      %v1656 = vand.u32 %v1655, 4294901760
      %v1657 = vsub.f32 %v1655, %v1656
      %v1658 = vand.u32 %v1657, 4294901760
      %1659 = vmatpush1.msra.mxu0 %v1658
      %1660 = vmatprep.subr.mxu0 0.0
      %v1661 = vand.u32 %v1398, 4294901760
      %v1662 = vsub.f32 %v1398, %v1661
      %v1663 = vand.u32 %v1662, 4294901760
      %v1664 = vsub.f32 %v1662, %v1663
      %v1665 = vand.u32 %v1664, 4294901760
      %1666 = vmatpush1.msra.mxu0 %v1665
      %1667 = vmatprep.subr.mxu0 0.0
      %v1668 = vand.u32 %v1399, 4294901760
      %v1669 = vsub.f32 %v1399, %v1668
      %v1670 = vand.u32 %v1669, 4294901760
      %v1671 = vsub.f32 %v1669, %v1670
      %v1672 = vand.u32 %v1671, 4294901760
      %1673 = vmatpush1.msra.mxu0 %v1672
      %1674 = vmatprep.subr.mxu0 0.0
      %v1675 = vand.u32 %v1400, 4294901760
      %v1676 = vsub.f32 %v1400, %v1675
      %v1677 = vand.u32 %v1676, 4294901760
      %v1678 = vsub.f32 %v1676, %v1677
      %v1679 = vand.u32 %v1678, 4294901760
      %1680 = vmatpush1.msra.mxu0 %v1679
      %1681 = vmatprep.subr.mxu0 0.0
      %1682 = vmatpush1.msra.mxu0 0.0
      %1683 = vmatprep.subr.mxu0 0.0
      %1684 = vmatpush1.msra.mxu0 0.0
      %1685 = vmatprep.subr.mxu0 0.0
      %1686 = vmatpush1.msra.mxu0 0.0
      %1687 = vmatprep.subr.mxu0 0.0
      %1688 = vmatpush1.msra.mxu0 0.0
      %1689 = vmatprep.subr.mxu0 0.0
      %1690 = vmatpush1.msra.mxu0 0.0
      %1691 = vmatprep.subr.mxu0 0.0
      %1692 = vmatpush1.msra.mxu0 0.0
      %1693 = vmatprep.subr.mxu0 0.0
      %1694 = vmatpush1.msra.mxu0 0.0
      %1695 = vmatprep.subr.mxu0 0.0
      %1696 = vmatpush1.msra.mxu0 0.0
      %1697 = vmatprep.subr.mxu0 0.0
      %1698 = vmatpush1.msra.mxu0 0.0
      %1699 = vmatprep.subr.mxu0 0.0
      %1700 = vmatpush1.msra.mxu0 0.0
      %1701 = vmatprep.subr.mxu0 0.0
      %1702 = vmatpush1.msra.mxu0 0.0
      %1703 = vmatprep.subr.mxu0 0.0
      %1704 = vmatpush1.msra.mxu0 0.0
      %1705 = vmatprep.subr.mxu0 0.0
      %1706 = vmatpush1.msra.mxu0 0.0
      %1707 = vmatprep.subr.mxu0 0.0
      %1708 = vmatpush1.msra.mxu0 0.0
      %1709 = vmatprep.subr.mxu0 0.0
      %1710 = vmatpush1.msra.mxu0 0.0
      %1711 = vmatprep.subr.mxu0 0.0
      %1712 = vmatpush1.msra.mxu0 0.0
      %1713 = vmatprep.mubr.f32.mxu0 0.0
      %v1714 = vand.u32 %v1377, 4294901760
      %1715 = vmatmul.mubr.f32.gmra.mrb[0].mxu0 %v1714
      %v1716 = vpop.f32.mrb[0].mxu0
      %v1717 = vadd.f32 %v1496, %v1716
      %v1718 = vpop.f32.mrb[0].mxu0
      %1719 = vmatprep.mubr.f32.mxu0 0.0
      %v1720 = vand.u32 %v1378, 4294901760
      %1721 = vmatmul.mubr.f32.gmra.mrb[0].mxu0 %v1720
      %v1722 = vpop.f32.mrb[0].mxu0
      %v1723 = vadd.f32 %v1506, %v1722
      %v1724 = vpop.f32.mrb[0].mxu0
      %1725 = vmatprep.mubr.f32.mxu0 0.0
      %v1726 = vand.u32 %v1379, 4294901760
      %1727 = vmatmul.mubr.f32.gmra.mrb[0].mxu0 %v1726
      %v1728 = vpop.f32.mrb[0].mxu0
      %v1729 = vadd.f32 %v1516, %v1728
      %v1730 = vpop.f32.mrb[0].mxu0
      %1731 = vmatprep.mubr.f32.mxu0 0.0
      %v1732 = vand.u32 %v1380, 4294901760
      %1733 = vmatmul.mubr.f32.gmra.mrb[0].mxu0 %v1732
      %v1734 = vpop.f32.mrb[0].mxu0
      %v1735 = vadd.f32 %v1526, %v1734
      %v1736 = vpop.f32.mrb[0].mxu0
      %1737 = vmatprep.mubr.f32.mxu0 0.0
      %v1738 = vand.u32 %v1381, 4294901760
      %1739 = vmatmul.mubr.f32.gmra.mrb[0].mxu0 %v1738
      %v1740 = vpop.f32.mrb[0].mxu0
      %v1741 = vadd.f32 %v1536, %v1740
      %v1742 = vpop.f32.mrb[0].mxu0
      %1743 = vmatprep.mubr.f32.mxu0 0.0
      %v1744 = vand.u32 %v1382, 4294901760
      %1745 = vmatmul.mubr.f32.gmra.mrb[0].mxu0 %v1744
      %v1746 = vpop.f32.mrb[0].mxu0
      %v1747 = vadd.f32 %v1546, %v1746
      %v1748 = vpop.f32.mrb[0].mxu0
      %1749 = vmatprep.mubr.f32.mxu0 0.0
      %v1750 = vand.u32 %v1383, 4294901760
      %1751 = vmatmul.mubr.f32.gmra.mrb[0].mxu0 %v1750
      %v1752 = vpop.f32.mrb[0].mxu0
      %v1753 = vadd.f32 %v1556, %v1752
      %v1754 = vpop.f32.mrb[0].mxu0
      %1755 = vmatprep.mubr.f32.mxu0 0.0
      %v1756 = vand.u32 %v1384, 4294901760
      %1757 = vmatmul.mubr.f32.gmra.mrb[0].mxu0 %v1756
      %v1758 = vpop.f32.mrb[0].mxu0
      %v1759 = vadd.f32 %v1566, %v1758
      %v1760 = vpop.f32.mrb[0].mxu0
      %1761 = vdwg.mxu0
      %1762 = vmatprep.subr.mxu0 0.0
      %v1763 = vand.u32 %v1385, 4294901760
      %v1764 = vsub.f32 %v1385, %v1763
      %1765 = vmatpush1.msra.mxu0 %v1764
      %1766 = vmatprep.subr.mxu0 0.0
      %v1767 = vand.u32 %v1386, 4294901760
      %v1768 = vsub.f32 %v1386, %v1767
      %1769 = vmatpush1.msra.mxu0 %v1768
      %1770 = vmatprep.subr.mxu0 0.0
      %v1771 = vand.u32 %v1387, 4294901760
      %v1772 = vsub.f32 %v1387, %v1771
      %1773 = vmatpush1.msra.mxu0 %v1772
      %1774 = vmatprep.subr.mxu0 0.0
      %v1775 = vand.u32 %v1388, 4294901760
      %v1776 = vsub.f32 %v1388, %v1775
      %1777 = vmatpush1.msra.mxu0 %v1776
      %1778 = vmatprep.subr.mxu0 0.0
      %v1779 = vand.u32 %v1389, 4294901760
      %v1780 = vsub.f32 %v1389, %v1779
      %1781 = vmatpush1.msra.mxu0 %v1780
      %1782 = vmatprep.subr.mxu0 0.0
      %v1783 = vand.u32 %v1390, 4294901760
      %v1784 = vsub.f32 %v1390, %v1783
      %1785 = vmatpush1.msra.mxu0 %v1784
      %1786 = vmatprep.subr.mxu0 0.0
      %v1787 = vand.u32 %v1391, 4294901760
      %v1788 = vsub.f32 %v1391, %v1787
      %1789 = vmatpush1.msra.mxu0 %v1788
      %1790 = vmatprep.subr.mxu0 0.0
      %v1791 = vand.u32 %v1392, 4294901760
      %v1792 = vsub.f32 %v1392, %v1791
      %1793 = vmatpush1.msra.mxu0 %v1792
      %1794 = vmatprep.subr.mxu0 0.0
      %v1795 = vand.u32 %v1393, 4294901760
      %v1796 = vsub.f32 %v1393, %v1795
      %1797 = vmatpush1.msra.mxu0 %v1796
      %1798 = vmatprep.subr.mxu0 0.0
      %v1799 = vand.u32 %v1394, 4294901760
      %v1800 = vsub.f32 %v1394, %v1799
      %1801 = vmatpush1.msra.mxu0 %v1800
      %1802 = vmatprep.subr.mxu0 0.0
      %v1803 = vand.u32 %v1395, 4294901760
      %v1804 = vsub.f32 %v1395, %v1803
      %1805 = vmatpush1.msra.mxu0 %v1804
      %1806 = vmatprep.subr.mxu0 0.0
      %v1807 = vand.u32 %v1396, 4294901760
      %v1808 = vsub.f32 %v1396, %v1807
      %1809 = vmatpush1.msra.mxu0 %v1808
      %1810 = vmatprep.subr.mxu0 0.0
      %v1811 = vand.u32 %v1397, 4294901760
      %v1812 = vsub.f32 %v1397, %v1811
      %1813 = vmatpush1.msra.mxu0 %v1812
      %1814 = vmatprep.subr.mxu0 0.0
      %v1815 = vand.u32 %v1398, 4294901760
      %v1816 = vsub.f32 %v1398, %v1815
      %1817 = vmatpush1.msra.mxu0 %v1816
      %1818 = vmatprep.subr.mxu0 0.0
      %v1819 = vand.u32 %v1399, 4294901760
      %v1820 = vsub.f32 %v1399, %v1819
      %1821 = vmatpush1.msra.mxu0 %v1820
      %1822 = vmatprep.subr.mxu0 0.0
      %v1823 = vand.u32 %v1400, 4294901760
      %v1824 = vsub.f32 %v1400, %v1823
      %1825 = vmatpush1.msra.mxu0 %v1824
      %1826 = vmatprep.subr.mxu0 0.0
      %1827 = vmatpush1.msra.mxu0 0.0
      %1828 = vmatprep.subr.mxu0 0.0
      %1829 = vmatpush1.msra.mxu0 0.0
      %1830 = vmatprep.subr.mxu0 0.0
      %1831 = vmatpush1.msra.mxu0 0.0
      %1832 = vmatprep.subr.mxu0 0.0
      %1833 = vmatpush1.msra.mxu0 0.0
      %1834 = vmatprep.subr.mxu0 0.0
      %1835 = vmatpush1.msra.mxu0 0.0
      %1836 = vmatprep.subr.mxu0 0.0
      %1837 = vmatpush1.msra.mxu0 0.0
      %1838 = vmatprep.subr.mxu0 0.0
      %1839 = vmatpush1.msra.mxu0 0.0
      %1840 = vmatprep.subr.mxu0 0.0
      %1841 = vmatpush1.msra.mxu0 0.0
      %1842 = vmatprep.subr.mxu0 0.0
      %1843 = vmatpush1.msra.mxu0 0.0
      %1844 = vmatprep.subr.mxu0 0.0
      %1845 = vmatpush1.msra.mxu0 0.0
      %1846 = vmatprep.subr.mxu0 0.0
      %1847 = vmatpush1.msra.mxu0 0.0
      %1848 = vmatprep.subr.mxu0 0.0
      %1849 = vmatpush1.msra.mxu0 0.0
      %1850 = vmatprep.subr.mxu0 0.0
      %1851 = vmatpush1.msra.mxu0 0.0
      %1852 = vmatprep.subr.mxu0 0.0
      %1853 = vmatpush1.msra.mxu0 0.0
      %1854 = vmatprep.subr.mxu0 0.0
      %1855 = vmatpush1.msra.mxu0 0.0
      %1856 = vmatprep.subr.mxu0 0.0
      %1857 = vmatpush1.msra.mxu0 0.0
      %1858 = vmatprep.mubr.f32.mxu0 0.0
      %v1859 = vand.u32 %v1377, 4294901760
      %v1860 = vsub.f32 %v1377, %v1859
      %1861 = vmatmul.mubr.f32.gmra.mrb[0].mxu0 %v1860
      %v1862 = vpop.f32.mrb[0].mxu0
      %v1863 = vadd.f32 %v1717, %v1862
      %v1864 = vpop.f32.mrb[0].mxu0
      %1865 = vmatprep.mubr.f32.mxu0 0.0
      %v1866 = vand.u32 %v1378, 4294901760
      %v1867 = vsub.f32 %v1378, %v1866
      %1868 = vmatmul.mubr.f32.gmra.mrb[0].mxu0 %v1867
      %v1869 = vpop.f32.mrb[0].mxu0
      %v1870 = vadd.f32 %v1723, %v1869
      %v1871 = vpop.f32.mrb[0].mxu0
      %1872 = vmatprep.mubr.f32.mxu0 0.0
      %v1873 = vand.u32 %v1379, 4294901760
      %v1874 = vsub.f32 %v1379, %v1873
      %1875 = vmatmul.mubr.f32.gmra.mrb[0].mxu0 %v1874
      %v1876 = vpop.f32.mrb[0].mxu0
      %v1877 = vadd.f32 %v1729, %v1876
      %v1878 = vpop.f32.mrb[0].mxu0
      %1879 = vmatprep.mubr.f32.mxu0 0.0
      %v1880 = vand.u32 %v1380, 4294901760
      %v1881 = vsub.f32 %v1380, %v1880
      %1882 = vmatmul.mubr.f32.gmra.mrb[0].mxu0 %v1881
      %v1883 = vpop.f32.mrb[0].mxu0
      %v1884 = vadd.f32 %v1735, %v1883
      %v1885 = vpop.f32.mrb[0].mxu0
      %1886 = vmatprep.mubr.f32.mxu0 0.0
      %v1887 = vand.u32 %v1381, 4294901760
      %v1888 = vsub.f32 %v1381, %v1887
      %1889 = vmatmul.mubr.f32.gmra.mrb[0].mxu0 %v1888
      %v1890 = vpop.f32.mrb[0].mxu0
      %v1891 = vadd.f32 %v1741, %v1890
      %v1892 = vpop.f32.mrb[0].mxu0
      %1893 = vmatprep.mubr.f32.mxu0 0.0
      %v1894 = vand.u32 %v1382, 4294901760
      %v1895 = vsub.f32 %v1382, %v1894
      %1896 = vmatmul.mubr.f32.gmra.mrb[0].mxu0 %v1895
      %v1897 = vpop.f32.mrb[0].mxu0
      %v1898 = vadd.f32 %v1747, %v1897
      %v1899 = vpop.f32.mrb[0].mxu0
      %1900 = vmatprep.mubr.f32.mxu0 0.0
      %v1901 = vand.u32 %v1383, 4294901760
      %v1902 = vsub.f32 %v1383, %v1901
      %1903 = vmatmul.mubr.f32.gmra.mrb[0].mxu0 %v1902
      %v1904 = vpop.f32.mrb[0].mxu0
      %v1905 = vadd.f32 %v1753, %v1904
      %v1906 = vpop.f32.mrb[0].mxu0
      %1907 = vmatprep.mubr.f32.mxu0 0.0
      %v1908 = vand.u32 %v1384, 4294901760
      %v1909 = vsub.f32 %v1384, %v1908
      %1910 = vmatmul.mubr.f32.gmra.mrb[0].mxu0 %v1909
      %v1911 = vpop.f32.mrb[0].mxu0
      %v1912 = vadd.f32 %v1759, %v1911
      %v1913 = vpop.f32.mrb[0].mxu0
      %1914 = vdwg.mxu0
      %1915 = vmatprep.subr.mxu0 0.0
      %v1916 = vand.u32 %v1385, 4294901760
      %1917 = vmatpush1.msra.mxu0 %v1916
      %1918 = vmatprep.subr.mxu0 0.0
      %v1919 = vand.u32 %v1386, 4294901760
      %1920 = vmatpush1.msra.mxu0 %v1919
      %1921 = vmatprep.subr.mxu0 0.0
      %v1922 = vand.u32 %v1387, 4294901760
      %1923 = vmatpush1.msra.mxu0 %v1922
      %1924 = vmatprep.subr.mxu0 0.0
      %v1925 = vand.u32 %v1388, 4294901760
      %1926 = vmatpush1.msra.mxu0 %v1925
      %1927 = vmatprep.subr.mxu0 0.0
      %v1928 = vand.u32 %v1389, 4294901760
      %1929 = vmatpush1.msra.mxu0 %v1928
      %1930 = vmatprep.subr.mxu0 0.0
      %v1931 = vand.u32 %v1390, 4294901760
      %1932 = vmatpush1.msra.mxu0 %v1931
      %1933 = vmatprep.subr.mxu0 0.0
      %v1934 = vand.u32 %v1391, 4294901760
      %1935 = vmatpush1.msra.mxu0 %v1934
      %1936 = vmatprep.subr.mxu0 0.0
      %v1937 = vand.u32 %v1392, 4294901760
      %1938 = vmatpush1.msra.mxu0 %v1937
      %1939 = vmatprep.subr.mxu0 0.0
      %v1940 = vand.u32 %v1393, 4294901760
      %1941 = vmatpush1.msra.mxu0 %v1940
      %1942 = vmatprep.subr.mxu0 0.0
      %v1943 = vand.u32 %v1394, 4294901760
      %1944 = vmatpush1.msra.mxu0 %v1943
      %1945 = vmatprep.subr.mxu0 0.0
      %v1946 = vand.u32 %v1395, 4294901760
      %1947 = vmatpush1.msra.mxu0 %v1946
      %1948 = vmatprep.subr.mxu0 0.0
      %v1949 = vand.u32 %v1396, 4294901760
      %1950 = vmatpush1.msra.mxu0 %v1949
      %1951 = vmatprep.subr.mxu0 0.0
      %v1952 = vand.u32 %v1397, 4294901760
      %1953 = vmatpush1.msra.mxu0 %v1952
      %1954 = vmatprep.subr.mxu0 0.0
      %v1955 = vand.u32 %v1398, 4294901760
      %1956 = vmatpush1.msra.mxu0 %v1955
      %1957 = vmatprep.subr.mxu0 0.0
      %v1958 = vand.u32 %v1399, 4294901760
      %1959 = vmatpush1.msra.mxu0 %v1958
      %1960 = vmatprep.subr.mxu0 0.0
      %v1961 = vand.u32 %v1400, 4294901760
      %1962 = vmatpush1.msra.mxu0 %v1961
      %1963 = vmatprep.subr.mxu0 0.0
      %1964 = vmatpush1.msra.mxu0 0.0
      %1965 = vmatprep.subr.mxu0 0.0
      %1966 = vmatpush1.msra.mxu0 0.0
      %1967 = vmatprep.subr.mxu0 0.0
      %1968 = vmatpush1.msra.mxu0 0.0
      %1969 = vmatprep.subr.mxu0 0.0
      %1970 = vmatpush1.msra.mxu0 0.0
      %1971 = vmatprep.subr.mxu0 0.0
      %1972 = vmatpush1.msra.mxu0 0.0
      %1973 = vmatprep.subr.mxu0 0.0
      %1974 = vmatpush1.msra.mxu0 0.0
      %1975 = vmatprep.subr.mxu0 0.0
      %1976 = vmatpush1.msra.mxu0 0.0
      %1977 = vmatprep.subr.mxu0 0.0
      %1978 = vmatpush1.msra.mxu0 0.0
      %1979 = vmatprep.subr.mxu0 0.0
      %1980 = vmatpush1.msra.mxu0 0.0
      %1981 = vmatprep.subr.mxu0 0.0
      %1982 = vmatpush1.msra.mxu0 0.0
      %1983 = vmatprep.subr.mxu0 0.0
      %1984 = vmatpush1.msra.mxu0 0.0
      %1985 = vmatprep.subr.mxu0 0.0
      %1986 = vmatpush1.msra.mxu0 0.0
      %1987 = vmatprep.subr.mxu0 0.0
      %1988 = vmatpush1.msra.mxu0 0.0
      %1989 = vmatprep.subr.mxu0 0.0
      %1990 = vmatpush1.msra.mxu0 0.0
      %1991 = vmatprep.subr.mxu0 0.0
      %1992 = vmatpush1.msra.mxu0 0.0
      %1993 = vmatprep.subr.mxu0 0.0
      %1994 = vmatpush1.msra.mxu0 0.0
      %1995 = vmatprep.mubr.f32.mxu0 0.0
      %v1996 = vand.u32 %v1377, 4294901760
      %v1997 = vsub.f32 %v1377, %v1996
      %v1998 = vand.u32 %v1997, 4294901760
      %1999 = vmatmul.mubr.f32.gmra.mrb[0].mxu0 %v1998
      %v2000 = vpop.f32.mrb[0].mxu0
      %v2001 = vadd.f32 %v1863, %v2000
      %v2002 = vpop.f32.mrb[0].mxu0
      %2003 = vmatprep.mubr.f32.mxu0 0.0
      %v2004 = vand.u32 %v1378, 4294901760
      %v2005 = vsub.f32 %v1378, %v2004
      %v2006 = vand.u32 %v2005, 4294901760
      %2007 = vmatmul.mubr.f32.gmra.mrb[0].mxu0 %v2006
      %v2008 = vpop.f32.mrb[0].mxu0
      %v2009 = vadd.f32 %v1870, %v2008
      %v2010 = vpop.f32.mrb[0].mxu0
      %2011 = vmatprep.mubr.f32.mxu0 0.0
      %v2012 = vand.u32 %v1379, 4294901760
      %v2013 = vsub.f32 %v1379, %v2012
      %v2014 = vand.u32 %v2013, 4294901760
      %2015 = vmatmul.mubr.f32.gmra.mrb[0].mxu0 %v2014
      %v2016 = vpop.f32.mrb[0].mxu0
      %v2017 = vadd.f32 %v1877, %v2016
      %v2018 = vpop.f32.mrb[0].mxu0
      %2019 = vmatprep.mubr.f32.mxu0 0.0
      %v2020 = vand.u32 %v1380, 4294901760
      %v2021 = vsub.f32 %v1380, %v2020
      %v2022 = vand.u32 %v2021, 4294901760
      %2023 = vmatmul.mubr.f32.gmra.mrb[0].mxu0 %v2022
      %v2024 = vpop.f32.mrb[0].mxu0
      %v2025 = vadd.f32 %v1884, %v2024
      %v2026 = vpop.f32.mrb[0].mxu0
      %2027 = vmatprep.mubr.f32.mxu0 0.0
      %v2028 = vand.u32 %v1381, 4294901760
      %v2029 = vsub.f32 %v1381, %v2028
      %v2030 = vand.u32 %v2029, 4294901760
      %2031 = vmatmul.mubr.f32.gmra.mrb[0].mxu0 %v2030
      %v2032 = vpop.f32.mrb[0].mxu0
      %v2033 = vadd.f32 %v1891, %v2032
      %v2034 = vpop.f32.mrb[0].mxu0
      %2035 = vmatprep.mubr.f32.mxu0 0.0
      %v2036 = vand.u32 %v1382, 4294901760
      %v2037 = vsub.f32 %v1382, %v2036
      %v2038 = vand.u32 %v2037, 4294901760
      %2039 = vmatmul.mubr.f32.gmra.mrb[0].mxu0 %v2038
      %v2040 = vpop.f32.mrb[0].mxu0
      %v2041 = vadd.f32 %v1898, %v2040
      %v2042 = vpop.f32.mrb[0].mxu0
      %2043 = vmatprep.mubr.f32.mxu0 0.0
      %v2044 = vand.u32 %v1383, 4294901760
      %v2045 = vsub.f32 %v1383, %v2044
      %v2046 = vand.u32 %v2045, 4294901760
      %2047 = vmatmul.mubr.f32.gmra.mrb[0].mxu0 %v2046
      %v2048 = vpop.f32.mrb[0].mxu0
      %v2049 = vadd.f32 %v1905, %v2048
      %v2050 = vpop.f32.mrb[0].mxu0
      %2051 = vmatprep.mubr.f32.mxu0 0.0
      %v2052 = vand.u32 %v1384, 4294901760
      %v2053 = vsub.f32 %v1384, %v2052
      %v2054 = vand.u32 %v2053, 4294901760
      %2055 = vmatmul.mubr.f32.gmra.mrb[0].mxu0 %v2054
      %v2056 = vpop.f32.mrb[0].mxu0
      %v2057 = vadd.f32 %v1912, %v2056
      %v2058 = vpop.f32.mrb[0].mxu0
      %2059 = vdwg.mxu0
      %2060 = vmatprep.subr.mxu0 0.0
      %v2061 = vand.u32 %v1385, 4294901760
      %v2062 = vsub.f32 %v1385, %v2061
      %v2063 = vand.u32 %v2062, 4294901760
      %2064 = vmatpush1.msra.mxu0 %v2063
      %2065 = vmatprep.subr.mxu0 0.0
      %v2066 = vand.u32 %v1386, 4294901760
      %v2067 = vsub.f32 %v1386, %v2066
      %v2068 = vand.u32 %v2067, 4294901760
      %2069 = vmatpush1.msra.mxu0 %v2068
      %2070 = vmatprep.subr.mxu0 0.0
      %v2071 = vand.u32 %v1387, 4294901760
      %v2072 = vsub.f32 %v1387, %v2071
      %v2073 = vand.u32 %v2072, 4294901760
      %2074 = vmatpush1.msra.mxu0 %v2073
      %2075 = vmatprep.subr.mxu0 0.0
      %v2076 = vand.u32 %v1388, 4294901760
      %v2077 = vsub.f32 %v1388, %v2076
      %v2078 = vand.u32 %v2077, 4294901760
      %2079 = vmatpush1.msra.mxu0 %v2078
      %2080 = vmatprep.subr.mxu0 0.0
      %v2081 = vand.u32 %v1389, 4294901760
      %v2082 = vsub.f32 %v1389, %v2081
      %v2083 = vand.u32 %v2082, 4294901760
      %2084 = vmatpush1.msra.mxu0 %v2083
      %2085 = vmatprep.subr.mxu0 0.0
      %v2086 = vand.u32 %v1390, 4294901760
      %v2087 = vsub.f32 %v1390, %v2086
      %v2088 = vand.u32 %v2087, 4294901760
      %2089 = vmatpush1.msra.mxu0 %v2088
      %2090 = vmatprep.subr.mxu0 0.0
      %v2091 = vand.u32 %v1391, 4294901760
      %v2092 = vsub.f32 %v1391, %v2091
      %v2093 = vand.u32 %v2092, 4294901760
      %2094 = vmatpush1.msra.mxu0 %v2093
      %2095 = vmatprep.subr.mxu0 0.0
      %v2096 = vand.u32 %v1392, 4294901760
      %v2097 = vsub.f32 %v1392, %v2096
      %v2098 = vand.u32 %v2097, 4294901760
      %2099 = vmatpush1.msra.mxu0 %v2098
      %2100 = vmatprep.subr.mxu0 0.0
      %v2101 = vand.u32 %v1393, 4294901760
      %v2102 = vsub.f32 %v1393, %v2101
      %v2103 = vand.u32 %v2102, 4294901760
      %2104 = vmatpush1.msra.mxu0 %v2103
      %2105 = vmatprep.subr.mxu0 0.0
      %v2106 = vand.u32 %v1394, 4294901760
      %v2107 = vsub.f32 %v1394, %v2106
      %v2108 = vand.u32 %v2107, 4294901760
      %2109 = vmatpush1.msra.mxu0 %v2108
      %2110 = vmatprep.subr.mxu0 0.0
      %v2111 = vand.u32 %v1395, 4294901760
      %v2112 = vsub.f32 %v1395, %v2111
      %v2113 = vand.u32 %v2112, 4294901760
      %2114 = vmatpush1.msra.mxu0 %v2113
      %2115 = vmatprep.subr.mxu0 0.0
      %v2116 = vand.u32 %v1396, 4294901760
      %v2117 = vsub.f32 %v1396, %v2116
      %v2118 = vand.u32 %v2117, 4294901760
      %2119 = vmatpush1.msra.mxu0 %v2118
      %2120 = vmatprep.subr.mxu0 0.0
      %v2121 = vand.u32 %v1397, 4294901760
      %v2122 = vsub.f32 %v1397, %v2121
      %v2123 = vand.u32 %v2122, 4294901760
      %2124 = vmatpush1.msra.mxu0 %v2123
      %2125 = vmatprep.subr.mxu0 0.0
      %v2126 = vand.u32 %v1398, 4294901760
      %v2127 = vsub.f32 %v1398, %v2126
      %v2128 = vand.u32 %v2127, 4294901760
      %2129 = vmatpush1.msra.mxu0 %v2128
      %2130 = vmatprep.subr.mxu0 0.0
      %v2131 = vand.u32 %v1399, 4294901760
      %v2132 = vsub.f32 %v1399, %v2131
      %v2133 = vand.u32 %v2132, 4294901760
      %2134 = vmatpush1.msra.mxu0 %v2133
      %2135 = vmatprep.subr.mxu0 0.0
      %v2136 = vand.u32 %v1400, 4294901760
      %v2137 = vsub.f32 %v1400, %v2136
      %v2138 = vand.u32 %v2137, 4294901760
      %2139 = vmatpush1.msra.mxu0 %v2138
      %2140 = vmatprep.subr.mxu0 0.0
      %2141 = vmatpush1.msra.mxu0 0.0
      %2142 = vmatprep.subr.mxu0 0.0
      %2143 = vmatpush1.msra.mxu0 0.0
      %2144 = vmatprep.subr.mxu0 0.0
      %2145 = vmatpush1.msra.mxu0 0.0
      %2146 = vmatprep.subr.mxu0 0.0
      %2147 = vmatpush1.msra.mxu0 0.0
      %2148 = vmatprep.subr.mxu0 0.0
      %2149 = vmatpush1.msra.mxu0 0.0
      %2150 = vmatprep.subr.mxu0 0.0
      %2151 = vmatpush1.msra.mxu0 0.0
      %2152 = vmatprep.subr.mxu0 0.0
      %2153 = vmatpush1.msra.mxu0 0.0
      %2154 = vmatprep.subr.mxu0 0.0
      %2155 = vmatpush1.msra.mxu0 0.0
      %2156 = vmatprep.subr.mxu0 0.0
      %2157 = vmatpush1.msra.mxu0 0.0
      %2158 = vmatprep.subr.mxu0 0.0
      %2159 = vmatpush1.msra.mxu0 0.0
      %2160 = vmatprep.subr.mxu0 0.0
      %2161 = vmatpush1.msra.mxu0 0.0
      %2162 = vmatprep.subr.mxu0 0.0
      %2163 = vmatpush1.msra.mxu0 0.0
      %2164 = vmatprep.subr.mxu0 0.0
      %2165 = vmatpush1.msra.mxu0 0.0
      %2166 = vmatprep.subr.mxu0 0.0
      %2167 = vmatpush1.msra.mxu0 0.0
      %2168 = vmatprep.subr.mxu0 0.0
      %2169 = vmatpush1.msra.mxu0 0.0
      %2170 = vmatprep.subr.mxu0 0.0
      %2171 = vmatpush1.msra.mxu0 0.0
      %2172 = vmatprep.mubr.f32.mxu0 0.0
      %v2173 = vand.u32 %v1377, 4294901760
      %2174 = vmatmul.mubr.f32.gmra.mrb[0].mxu0 %v2173
      %v2175 = vpop.f32.mrb[0].mxu0
      %v2176 = vadd.f32 %v2001, %v2175
      %v2177 = vpop.f32.mrb[0].mxu0
      %2178 = vmatprep.mubr.f32.mxu0 0.0
      %v2179 = vand.u32 %v1378, 4294901760
      %2180 = vmatmul.mubr.f32.gmra.mrb[0].mxu0 %v2179
      %v2181 = vpop.f32.mrb[0].mxu0
      %v2182 = vadd.f32 %v2009, %v2181
      %v2183 = vpop.f32.mrb[0].mxu0
      %2184 = vmatprep.mubr.f32.mxu0 0.0
      %v2185 = vand.u32 %v1379, 4294901760
      %2186 = vmatmul.mubr.f32.gmra.mrb[0].mxu0 %v2185
      %v2187 = vpop.f32.mrb[0].mxu0
      %v2188 = vadd.f32 %v2017, %v2187
      %v2189 = vpop.f32.mrb[0].mxu0
      %2190 = vmatprep.mubr.f32.mxu0 0.0
      %v2191 = vand.u32 %v1380, 4294901760
      %2192 = vmatmul.mubr.f32.gmra.mrb[0].mxu0 %v2191
      %v2193 = vpop.f32.mrb[0].mxu0
      %v2194 = vadd.f32 %v2025, %v2193
      %v2195 = vpop.f32.mrb[0].mxu0
      %2196 = vmatprep.mubr.f32.mxu0 0.0
      %v2197 = vand.u32 %v1381, 4294901760
      %2198 = vmatmul.mubr.f32.gmra.mrb[0].mxu0 %v2197
      %v2199 = vpop.f32.mrb[0].mxu0
      %v2200 = vadd.f32 %v2033, %v2199
      %v2201 = vpop.f32.mrb[0].mxu0
      %2202 = vmatprep.mubr.f32.mxu0 0.0
      %v2203 = vand.u32 %v1382, 4294901760
      %2204 = vmatmul.mubr.f32.gmra.mrb[0].mxu0 %v2203
      %v2205 = vpop.f32.mrb[0].mxu0
      %v2206 = vadd.f32 %v2041, %v2205
      %v2207 = vpop.f32.mrb[0].mxu0
      %2208 = vmatprep.mubr.f32.mxu0 0.0
      %v2209 = vand.u32 %v1383, 4294901760
      %2210 = vmatmul.mubr.f32.gmra.mrb[0].mxu0 %v2209
      %v2211 = vpop.f32.mrb[0].mxu0
      %v2212 = vadd.f32 %v2049, %v2211
      %v2213 = vpop.f32.mrb[0].mxu0
      %2214 = vmatprep.mubr.f32.mxu0 0.0
      %v2215 = vand.u32 %v1384, 4294901760
      %2216 = vmatmul.mubr.f32.gmra.mrb[0].mxu0 %v2215
      %v2217 = vpop.f32.mrb[0].mxu0
      %v2218 = vadd.f32 %v2057, %v2217
      %v2219 = vpop.f32.mrb[0].mxu0
      %2220 = vdwg.mxu0
      %2221 = vmatprep.subr.mxu0 0.0
      %v2222 = vand.u32 %v1385, 4294901760
      %2223 = vmatpush1.msra.mxu0 %v2222
      %2224 = vmatprep.subr.mxu0 0.0
      %v2225 = vand.u32 %v1386, 4294901760
      %2226 = vmatpush1.msra.mxu0 %v2225
      %2227 = vmatprep.subr.mxu0 0.0
      %v2228 = vand.u32 %v1387, 4294901760
      %2229 = vmatpush1.msra.mxu0 %v2228
      %2230 = vmatprep.subr.mxu0 0.0
      %v2231 = vand.u32 %v1388, 4294901760
      %2232 = vmatpush1.msra.mxu0 %v2231
      %2233 = vmatprep.subr.mxu0 0.0
      %v2234 = vand.u32 %v1389, 4294901760
      %2235 = vmatpush1.msra.mxu0 %v2234
      %2236 = vmatprep.subr.mxu0 0.0
      %v2237 = vand.u32 %v1390, 4294901760
      %2238 = vmatpush1.msra.mxu0 %v2237
      %2239 = vmatprep.subr.mxu0 0.0
      %v2240 = vand.u32 %v1391, 4294901760
      %2241 = vmatpush1.msra.mxu0 %v2240
      %2242 = vmatprep.subr.mxu0 0.0
      %v2243 = vand.u32 %v1392, 4294901760
      %2244 = vmatpush1.msra.mxu0 %v2243
      %2245 = vmatprep.subr.mxu0 0.0
      %v2246 = vand.u32 %v1393, 4294901760
      %2247 = vmatpush1.msra.mxu0 %v2246
      %2248 = vmatprep.subr.mxu0 0.0
      %v2249 = vand.u32 %v1394, 4294901760
      %2250 = vmatpush1.msra.mxu0 %v2249
      %2251 = vmatprep.subr.mxu0 0.0
      %v2252 = vand.u32 %v1395, 4294901760
      %2253 = vmatpush1.msra.mxu0 %v2252
      %2254 = vmatprep.subr.mxu0 0.0
      %v2255 = vand.u32 %v1396, 4294901760
      %2256 = vmatpush1.msra.mxu0 %v2255
      %2257 = vmatprep.subr.mxu0 0.0
      %v2258 = vand.u32 %v1397, 4294901760
      %2259 = vmatpush1.msra.mxu0 %v2258
      %2260 = vmatprep.subr.mxu0 0.0
      %v2261 = vand.u32 %v1398, 4294901760
      %2262 = vmatpush1.msra.mxu0 %v2261
      %2263 = vmatprep.subr.mxu0 0.0
      %v2264 = vand.u32 %v1399, 4294901760
      %2265 = vmatpush1.msra.mxu0 %v2264
      %2266 = vmatprep.subr.mxu0 0.0
      %v2267 = vand.u32 %v1400, 4294901760
      %2268 = vmatpush1.msra.mxu0 %v2267
      %2269 = vmatprep.subr.mxu0 0.0
      %2270 = vmatpush1.msra.mxu0 0.0
      %2271 = vmatprep.subr.mxu0 0.0
      %2272 = vmatpush1.msra.mxu0 0.0
      %2273 = vmatprep.subr.mxu0 0.0
      %2274 = vmatpush1.msra.mxu0 0.0
      %2275 = vmatprep.subr.mxu0 0.0
      %2276 = vmatpush1.msra.mxu0 0.0
      %2277 = vmatprep.subr.mxu0 0.0
      %2278 = vmatpush1.msra.mxu0 0.0
      %2279 = vmatprep.subr.mxu0 0.0
      %2280 = vmatpush1.msra.mxu0 0.0
      %2281 = vmatprep.subr.mxu0 0.0
      %2282 = vmatpush1.msra.mxu0 0.0
      %2283 = vmatprep.subr.mxu0 0.0
      %2284 = vmatpush1.msra.mxu0 0.0
      %2285 = vmatprep.subr.mxu0 0.0
      %2286 = vmatpush1.msra.mxu0 0.0
      %2287 = vmatprep.subr.mxu0 0.0
      %2288 = vmatpush1.msra.mxu0 0.0
      %2289 = vmatprep.subr.mxu0 0.0
      %2290 = vmatpush1.msra.mxu0 0.0
      %2291 = vmatprep.subr.mxu0 0.0
      %2292 = vmatpush1.msra.mxu0 0.0
      %2293 = vmatprep.subr.mxu0 0.0
      %2294 = vmatpush1.msra.mxu0 0.0
      %2295 = vmatprep.subr.mxu0 0.0
      %2296 = vmatpush1.msra.mxu0 0.0
      %2297 = vmatprep.subr.mxu0 0.0
      %2298 = vmatpush1.msra.mxu0 0.0
      %2299 = vmatprep.subr.mxu0 0.0
      %2300 = vmatpush1.msra.mxu0 0.0
      %2301 = vmatprep.mubr.f32.mxu0 0.0
      %v2302 = vand.u32 %v1377, 4294901760
      %2303 = vmatmul.mubr.f32.gmra.mrb[0].mxu0 %v2302
      %v2304 = vpop.f32.mrb[0].mxu0
      %v2305 = vadd.f32 %v2176, %v2304
      %v2306 = vpop.f32.mrb[0].mxu0
      %2307 = vmatprep.mubr.f32.mxu0 0.0
      %v2308 = vand.u32 %v1378, 4294901760
      %2309 = vmatmul.mubr.f32.gmra.mrb[0].mxu0 %v2308
      %v2310 = vpop.f32.mrb[0].mxu0
      %v2311 = vadd.f32 %v2182, %v2310
      %v2312 = vpop.f32.mrb[0].mxu0
      %2313 = vmatprep.mubr.f32.mxu0 0.0
      %v2314 = vand.u32 %v1379, 4294901760
      %2315 = vmatmul.mubr.f32.gmra.mrb[0].mxu0 %v2314
      %v2316 = vpop.f32.mrb[0].mxu0
      %v2317 = vadd.f32 %v2188, %v2316
      %v2318 = vpop.f32.mrb[0].mxu0
      %2319 = vmatprep.mubr.f32.mxu0 0.0
      %v2320 = vand.u32 %v1380, 4294901760
      %2321 = vmatmul.mubr.f32.gmra.mrb[0].mxu0 %v2320
      %v2322 = vpop.f32.mrb[0].mxu0
      %v2323 = vadd.f32 %v2194, %v2322
      %v2324 = vpop.f32.mrb[0].mxu0
      %2325 = vmatprep.mubr.f32.mxu0 0.0
      %v2326 = vand.u32 %v1381, 4294901760
      %2327 = vmatmul.mubr.f32.gmra.mrb[0].mxu0 %v2326
      %v2328 = vpop.f32.mrb[0].mxu0
      %v2329 = vadd.f32 %v2200, %v2328
      %v2330 = vpop.f32.mrb[0].mxu0
      %2331 = vmatprep.mubr.f32.mxu0 0.0
      %v2332 = vand.u32 %v1382, 4294901760
      %2333 = vmatmul.mubr.f32.gmra.mrb[0].mxu0 %v2332
      %v2334 = vpop.f32.mrb[0].mxu0
      %v2335 = vadd.f32 %v2206, %v2334
      %v2336 = vpop.f32.mrb[0].mxu0
      %2337 = vmatprep.mubr.f32.mxu0 0.0
      %v2338 = vand.u32 %v1383, 4294901760
      %2339 = vmatmul.mubr.f32.gmra.mrb[0].mxu0 %v2338
      %v2340 = vpop.f32.mrb[0].mxu0
      %v2341 = vadd.f32 %v2212, %v2340
      %v2342 = vpop.f32.mrb[0].mxu0
      %2343 = vmatprep.mubr.f32.mxu0 0.0
      %v2344 = vand.u32 %v1384, 4294901760
      %2345 = vmatmul.mubr.f32.gmra.mrb[0].mxu0 %v2344
      %v2346 = vpop.f32.mrb[0].mxu0
      %v2347 = vadd.f32 %v2218, %v2346
      %v2348 = vpop.f32.mrb[0].mxu0
      %2349 = vdwg.mxu0
      %vm2350 = vcmp.ge.f32.partialorder %v2305, 0.0
      %vm2351 = vcmp.ge.f32.partialorder %v2311, 0.0
      %vm2352 = vcmp.ge.f32.partialorder %v2317, 0.0
      %vm2353 = vcmp.ge.f32.partialorder %v2323, 0.0
      %vm2354 = vcmp.ge.f32.partialorder %v2329, 0.0
      %vm2355 = vcmp.ge.f32.partialorder %v2335, 0.0
      %vm2356 = vcmp.ge.f32.partialorder %v2341, 0.0
      %vm2357 = vcmp.ge.f32.partialorder %v2347, 0.0
      %v2358 = vmul.f32 %v2305, 0.1
      %v2359 = vmul.f32 %v2311, 0.1
      %v2360 = vmul.f32 %v2317, 0.1
      %v2361 = vmul.f32 %v2323, 0.1
      %v2362 = vmul.f32 %v2329, 0.1
      %v2363 = vmul.f32 %v2335, 0.1
      %v2364 = vmul.f32 %v2341, 0.1
      %v2365 = vmul.f32 %v2347, 0.1
      %v2366 = vsel %vm2350, %v2305, %v2358
      %v2367 = vsel %vm2351, %v2311, %v2359
      %v2368 = vsel %vm2352, %v2317, %v2360
      %v2369 = vsel %vm2353, %v2323, %v2361
      %v2370 = vsel %vm2354, %v2329, %v2362
      %v2371 = vsel %vm2355, %v2335, %v2363
      %v2372 = vsel %vm2356, %v2341, %v2364
      %v2373 = vsel %vm2357, %v2347, %v2365
      %v2374 = vld [vmem:[%s6] sm:$0x1]
      %v2376 = vlaneseq
      %v2377 = vshrl.u32 %v2376, 7
      %v2378 = vsub.s32 0, %v2377
      %v2379 = vrot.slane %v2374, %v2378
      %v2381 = vmul.f32 %v2366, %v2379
      %v2382 = vmul.f32 %v2367, %v2379
      %v2383 = vmul.f32 %v2368, %v2379
      %v2384 = vmul.f32 %v2369, %v2379
      %v2385 = vmul.f32 %v2370, %v2379
      %v2386 = vmul.f32 %v2371, %v2379
      %v2387 = vmul.f32 %v2372, %v2379
      %v2388 = vmul.f32 %v2373, %v2379
      %2389 = vadd.xlane.f32.xlu0 %v2381
      %v2390 = vpop.xlane.xlu0 %2389
      %2391 = vadd.xlane.f32.xlu0 %v2382
      %v2392 = vpop.xlane.xlu0 %2391
      %2393 = vadd.xlane.f32.xlu0 %v2383
      %v2394 = vpop.xlane.xlu0 %2393
      %2395 = vadd.xlane.f32.xlu0 %v2384
      %v2396 = vpop.xlane.xlu0 %2395
      %2397 = vadd.xlane.f32.xlu0 %v2385
      %v2398 = vpop.xlane.xlu0 %2397
      %2399 = vadd.xlane.f32.xlu0 %v2386
      %v2400 = vpop.xlane.xlu0 %2399
      %2401 = vadd.xlane.f32.xlu0 %v2387
      %v2402 = vpop.xlane.xlu0 %2401
      %2403 = vadd.xlane.f32.xlu0 %v2388
      %v2404 = vpop.xlane.xlu0 %2403
      %v2405 = vld [vmem:[#allocation3] sm:$0x1]
      %v2407 = vlaneseq
      %v2408 = vshrl.u32 %v2407, 7
      %v2409 = vsub.s32 0, %v2408
      %v2410 = vrot.slane %v2405, %v2409
      %v2412 = vadd.f32 %v2390, %v2410
      %v2413 = vadd.f32 %v2392, %v2410
      %v2414 = vadd.f32 %v2394, %v2410
      %v2415 = vadd.f32 %v2396, %v2410
      %v2416 = vadd.f32 %v2398, %v2410
      %v2417 = vadd.f32 %v2400, %v2410
      %v2418 = vadd.f32 %v2402, %v2410
      %v2419 = vadd.f32 %v2404, %v2410
      %vm2420 = vcmask 7168
      %2421 = vst.msk [vmem:[%s309] sm:$0xff] %vm2420, %v2412
      %2422 = vst.msk [vmem:[%s309 + $0x8] sm:$0xff] %vm2420, %v2413
      %2423 = vst.msk [vmem:[%s309 + $0x10] sm:$0xff] %vm2420, %v2414
      %2424 = vst.msk [vmem:[%s309 + $0x18] sm:$0xff] %vm2420, %v2415
      %2425 = vst.msk [vmem:[%s309 + $0x20] sm:$0xff] %vm2420, %v2416
      %2426 = vst.msk [vmem:[%s309 + $0x28] sm:$0xff] %vm2420, %v2417
      %2427 = vst.msk [vmem:[%s309 + $0x30] sm:$0xff] %vm2420, %v2418
      %2428 = vst.msk [vmem:[%s309 + $0x38] sm:$0xff] %vm2420, %v2419
      %s2429 = smul.u32 8, %s21
      %p2430 = scmp.lt.s32.totalorder %s2429, 31
      %s2431 = scalar_select %p2430, %s2429, 31
      %s2432 = smul.addr %s2431, 8
      %s2433 = scalar_lea.vmem %s8, %s2432
      // Predicated region
      $region53: #{discriminator_forward.1} parent=51 // pred_check
        %p2434 = pneg %p212
      $region54: #{discriminator_forward.1} parent=51 // pred_check_branch
        %2436 = sbr.rel (%p2434) target = $region56
      $region55: #{discriminator_forward.1} parent=51 // pred_region
        %s2437 = smul.u32 8, %s21
      $region56: #{discriminator_forward.1} parent=51 // pred_fallthru
        _
    $region52: #{discriminator_forward.1} parent=5 // pred_fallthru
      _
    %p2438 = scmp.le.s32.totalorder 2, %s16
    // Predicated region
    $region57: #{discriminator_forward.1} parent=5 // pred_check
      %p2439 = pneg %p2438
    $region58: #{discriminator_forward.1} parent=5 // pred_check_branch
      %2441 = sbr.rel (%p2439) target = $region60
    $region59: #{discriminator_forward.1} parent=5 // pred_region
      %s2442 = ssub.s32 %s16, 2
      // Predicated region
      $region61: #{discriminator_forward.1} parent=59 // pred_check
        %p2443 = pneg %p218
      $region62: #{discriminator_forward.1} parent=59 // pred_check_branch
        %2445 = sbr.rel (%p2443) target = $region64
      $region63: #{discriminator_forward.1} parent=59 // pred_region
        %s2446 = smul.u32 8, %s22
        %p2447 = scmp.lt.s32.totalorder %s2446, 31
        %s2448 = scalar_select %p2447, %s2446, 31
        %s2449 = smul.addr %s2448, 8
        %s2450 = scalar_lea.vmem %s8, %s2449
      $region64: #{discriminator_forward.1} parent=59 // pred_fallthru
        _
    $region60: #{discriminator_forward.1} parent=5 // pred_fallthru
      _
  $region6: #{discriminator_forward.1} parent=0 // loop_footer
    %s20 = sadd.s32 1, %s16
  $region7: #{discriminator_forward.1} parent=0 // loop_footer_branch
    %15 = sbr.rel target = $region3
  $region8: #{discriminator_forward.1} parent=0 // loop_exit
    _

</llo_original>
